<compile_context>
chip_gen: v7x
topology: tpu7x:2x2x1
jax: 0.10.0
libtpu: 0.0.40
codegen_flags: <defaults>
</compile_context>

<pallas_src>
import functools

import jax
import jax.numpy as jnp
import numpy as np
from jax.experimental import pallas as pl
from jax.experimental.pallas import tpu as pltpu

LANE = 128     # vreg lane width
SUBLANE = 8    # vreg sublane width


# ----------------------------------------------------------------------------
# small helpers
# ----------------------------------------------------------------------------
def _round_up(x, m):
    return ((x + m - 1) // m) * m


def _cdiv(a, b):
    return (a + b - 1) // b


def _pad_to(a, shape):
    return jnp.pad(a, [(0, t - s) for s, t in zip(a.shape, shape)])


def _m_tiling(m, tm_max):
    """Split M (rounded to the sublane width) into equal tiles of <= tm_max rows."""
    m8 = _round_up(m, SUBLANE)
    n_tiles = _cdiv(m8, tm_max)
    tm = _round_up(_cdiv(m8, n_tiles), SUBLANE)
    return tm, n_tiles, tm * n_tiles


# ----------------------------------------------------------------------------
# Pallas kernels
# ----------------------------------------------------------------------------
def _matmul_bias_act_kernel(x_ref, w_ref, b_ref, o_ref, *, relu):
    """o = relu?(x @ w + b).  bf16 operands, fp32 accumulate + fp32 epilogue."""
    acc = jnp.dot(x_ref[...], w_ref[...], preferred_element_type=jnp.float32)
    acc = acc + b_ref[...]
    if relu:
        acc = jnp.maximum(acc, 0.0)
    o_ref[...] = acc.astype(o_ref.dtype)


def _fc_chain_kernel(x_ref, w1_ref, b1_ref, w2_ref, b2_ref, w3_ref, b3_ref, o_ref):
    """Fused fc1->relu->fc2->relu->fc3; intermediates stay in vregs/VMEM."""
    h = jnp.dot(x_ref[...], w1_ref[...], preferred_element_type=jnp.float32) + b1_ref[...]
    h = jnp.maximum(h, 0.0).astype(w2_ref.dtype)
    h = jnp.dot(h, w2_ref[...], preferred_element_type=jnp.float32) + b2_ref[...]
    h = jnp.maximum(h, 0.0).astype(w3_ref.dtype)
    o = jnp.dot(h, w3_ref[...], preferred_element_type=jnp.float32) + b3_ref[...]
    o_ref[...] = o.astype(o_ref.dtype)


def _maxpool_reduce_kernel(x_ref, o_ref):
    """x:(4, TM, C) pre-gathered 2x2 taps -> o:(TM, C), lane-dense max."""
    o_ref[...] = jnp.max(x_ref[...], axis=0)


# ----------------------------------------------------------------------------
# Pallas wrappers
# ----------------------------------------------------------------------------
def matmul_bias(x, w_pad, b_pad, *, relu, tm_max=512):
    """relu?(x @ w_pad + b_pad), M-tiled, lane-dense padded output.

    x:(M,K) any float; w_pad:(K_pad,N_pad) bf16 zero-padded; b_pad:(1,N_pad) f32.
    Returns (M, N_pad) f32 (padded N columns are exactly relu?(0)=0).
    """
    M, _ = x.shape
    K_pad, N_pad = w_pad.shape
    tm, n_tiles, M_pad = _m_tiling(M, tm_max)
    x_pad = _pad_to(x.astype(jnp.bfloat16), (M_pad, K_pad))
    out = pl.pallas_call(
        functools.partial(_matmul_bias_act_kernel, relu=relu),
        out_shape=jax.ShapeDtypeStruct((M_pad, N_pad), jnp.float32),
        grid=(n_tiles,),
        in_specs=[
            pl.BlockSpec((tm, K_pad), lambda i: (i, 0)),     # activations: tiled, double-buffered
            pl.BlockSpec((K_pad, N_pad), lambda i: (0, 0)),  # weights: resident across tiles
            pl.BlockSpec((1, N_pad), lambda i: (0, 0)),      # bias: resident
        ],
        out_specs=pl.BlockSpec((tm, N_pad), lambda i: (i, 0)),
        compiler_params=pltpu.CompilerParams(
            dimension_semantics=("parallel",)),              # shards tiles on v7x's 2 TCs
    )(x_pad, w_pad, b_pad)
    return out[:M]


def fc_chain(x, w1, b1, w2, b2, w3, b3, *, tm_max=512):
    """Fused fc1/fc2/fc3 in a single pallas_call.  Returns (M, N3_pad) f32."""
    M, _ = x.shape
    K1_pad, N1_pad = w1.shape
    N2_pad = w2.shape[1]
    N3_pad = w3.shape[1]
    tm, n_tiles, M_pad = _m_tiling(M, tm_max)
    x_pad = _pad_to(x.astype(jnp.bfloat16), (M_pad, K1_pad))
    out = pl.pallas_call(
        _fc_chain_kernel,
        out_shape=jax.ShapeDtypeStruct((M_pad, N3_pad), jnp.float32),
        grid=(n_tiles,),
        in_specs=[
            pl.BlockSpec((tm, K1_pad), lambda i: (i, 0)),
            pl.BlockSpec((K1_pad, N1_pad), lambda i: (0, 0)),
            pl.BlockSpec((1, N1_pad), lambda i: (0, 0)),
            pl.BlockSpec((N1_pad, N2_pad), lambda i: (0, 0)),
            pl.BlockSpec((1, N2_pad), lambda i: (0, 0)),
            pl.BlockSpec((N2_pad, N3_pad), lambda i: (0, 0)),
            pl.BlockSpec((1, N3_pad), lambda i: (0, 0)),
        ],
        out_specs=pl.BlockSpec((tm, N3_pad), lambda i: (i, 0)),
        compiler_params=pltpu.CompilerParams(
            dimension_semantics=("parallel",)),
    )(x_pad, w1, b1, w2, b2, w3, b3)
    return out[:M]


def maxpool2x2_nhwc(x, *, tm_max=512):
    """MaxPool2d(2,2) on NHWC with a lane-dense channel axis (C multiple of 128)."""
    B, H, W, C = x.shape
    Ho, Wo = H // 2, W // 2
    # Gather the 4 taps of each 2x2 window; channel axis stays lane-dense.
    taps = jnp.stack([x[:, di::2, dj::2, :] for di in (0, 1) for dj in (0, 1)], axis=0)
    M = B * Ho * Wo
    tm, n_tiles, M_pad = _m_tiling(M, tm_max)
    taps = _pad_to(taps.reshape(4, M, C), (4, M_pad, C))
    out = pl.pallas_call(
        _maxpool_reduce_kernel,
        out_shape=jax.ShapeDtypeStruct((M_pad, C), x.dtype),
        grid=(n_tiles,),
        in_specs=[pl.BlockSpec((4, tm, C), lambda i: (0, i, 0))],
        out_specs=pl.BlockSpec((tm, C), lambda i: (i, 0)),
        compiler_params=pltpu.CompilerParams(
            dimension_semantics=("parallel",)),
    )(taps)
    return out[:M].reshape(B, Ho, Wo, C)


def conv2d_relu_nhwc(x, w_pad, b_pad, *, k=5):
    """Valid conv (stride 1) + bias + ReLU via bf16 im2col + fused MXU matmul.

    x NHWC (B,H,W,Cin); w_pad (K_pad, Cout_pad) bf16 = PyTorch (Cout,Cin,k,k)
    flattened, transposed, zero-padded.  Returns NHWC (B, Ho, Wo, Cout_pad) f32.
    """
    B, H, W, Cin = x.shape
    Ho, Wo = H - k + 1, W - k + 1
    # im2col: patch channel order is (cin, kh, kw) -> matches PyTorch flattening.
    patches = jax.lax.conv_general_dilated_patches(
        x.astype(jnp.bfloat16), (k, k), (1, 1), "VALID",
        dimension_numbers=("NHWC", "HWIO", "NHWC"))        # (B,Ho,Wo,Cin*k*k)
    patches = patches.reshape(B * Ho * Wo, Cin * k * k)
    y = matmul_bias(patches, w_pad, b_pad, relu=True)       # (B*Ho*Wo, Cout_pad)
    return y.reshape(B, Ho, Wo, w_pad.shape[1])


# ----------------------------------------------------------------------------
# Parameters (PyTorch-layout init) + one-time layout prep
# ----------------------------------------------------------------------------
def init_params(key, num_classes=10, in_channels=3):
    ks = jax.random.split(key, 10)

    def u(k, shape, fan_in):
        bound = 1.0 / float(fan_in) ** 0.5
        return jax.random.uniform(k, shape, jnp.float32, -bound, bound)

    p = {}
    p["conv1_w"] = u(ks[0], (6, in_channels, 5, 5), in_channels * 25)
    p["conv1_b"] = u(ks[1], (6,), in_channels * 25)
    p["conv2_w"] = u(ks[2], (16, 6, 5, 5), 6 * 25)
    p["conv2_b"] = u(ks[3], (16,), 6 * 25)
    p["fc1_w"] = u(ks[4], (120, 16 * 5 * 5), 16 * 5 * 5)
    p["fc1_b"] = u(ks[5], (120,), 16 * 5 * 5)
    p["fc2_w"] = u(ks[6], (84, 120), 120)
    p["fc2_b"] = u(ks[7], (84,), 120)
    p["fc3_w"] = u(ks[8], (num_classes, 84), 84)
    p["fc3_b"] = u(ks[9], (num_classes,), 84)
    return p


def prepare_params(p):
    """Transpose, zero-pad K/N to multiples of 128 and cast weights to bf16 ONCE."""
    def pad_w(w_kn):
        K, N = w_kn.shape
        return _pad_to(w_kn, (_round_up(K, LANE), _round_up(N, LANE))).astype(jnp.bfloat16)

    def pad_b(b):
        return _pad_to(b.reshape(1, -1).astype(jnp.float32),
                       (1, _round_up(b.shape[0], LANE)))

    q = {}
    q["conv1_w"] = pad_w(p["conv1_w"].reshape(p["conv1_w"].shape[0], -1).T)
    q["conv1_b"] = pad_b(p["conv1_b"])
    q["conv2_w"] = pad_w(p["conv2_w"].reshape(p["conv2_w"].shape[0], -1).T)
    q["conv2_b"] = pad_b(p["conv2_b"])
    # fc1 consumes the (h, w, c)-ordered flatten of the NHWC pooled activations,
    # so permute its columns from PyTorch's (c, h, w) order once here.
    fc1_w = p["fc1_w"].reshape(-1, 16, 5, 5).transpose(0, 2, 3, 1).reshape(-1, 16 * 5 * 5)
    q["fc1_w"] = pad_w(fc1_w.T)
    q["fc1_b"] = pad_b(p["fc1_b"])
    q["fc2_w"] = pad_w(p["fc2_w"].T)
    q["fc2_b"] = pad_b(p["fc2_b"])
    q["fc3_w"] = pad_w(p["fc3_w"].T)
    q["fc3_b"] = pad_b(p["fc3_b"])
    return q


# ----------------------------------------------------------------------------
# Forward pass
# ----------------------------------------------------------------------------
def lenet_forward(x_nchw, prep, num_classes=10):
    B = x_nchw.shape[0]
    x = jnp.transpose(x_nchw, (0, 2, 3, 1))                             # NHWC
    y = conv2d_relu_nhwc(x, prep["conv1_w"], prep["conv1_b"])           # (B,28,28,128)
    y = maxpool2x2_nhwc(y)                                              # (B,14,14,128)
    y = conv2d_relu_nhwc(y[..., :6], prep["conv2_w"], prep["conv2_b"])  # (B,10,10,128)
    y = maxpool2x2_nhwc(y)                                              # (B, 5, 5,128)
    y = y[..., :16].reshape(B, 16 * 5 * 5)      # (h,w,c) flatten; fc1_w pre-permuted
    y = fc_chain(y, prep["fc1_w"], prep["fc1_b"],
                 prep["fc2_w"], prep["fc2_b"],
                 prep["fc3_w"], prep["fc3_b"])                          # (B, 128)
    return y[:, :num_classes]


# Pure-JAX fp32 reference of the same module (for a sanity check only).
def lenet_reference(x, p):
    def conv(x, w, b):
        y = jax.lax.conv_general_dilated(
            x, w, (1, 1), "VALID", dimension_numbers=("NCHW", "OIHW", "NCHW"))
        return jax.nn.relu(y + b[None, :, None, None])

    def pool(x):
        return jax.lax.reduce_window(x, -jnp.inf, jax.lax.max,
                                     (1, 1, 2, 2), (1, 1, 2, 2), "VALID")

    y = pool(conv(x, p["conv1_w"], p["conv1_b"]))
    y = pool(conv(y, p["conv2_w"], p["conv2_b"]))
    y = y.reshape(x.shape[0], -1)
    y = jax.nn.relu(y @ p["fc1_w"].T + p["fc1_b"])
    y = jax.nn.relu(y @ p["fc2_w"].T + p["fc2_b"])
    return y @ p["fc3_w"].T + p["fc3_b"]


if __name__ == "__main__":
    key = jax.random.PRNGKey(0)
    xkey, pkey = jax.random.split(key)
    # LeNet geometry requires 32x32 spatial input for the 16*5*5 flatten.
    x = jax.random.normal(xkey, (2, 3, 32, 32), dtype=jnp.float32)
    params = init_params(pkey, num_classes=10, in_channels=3)
    prep = prepare_params(params)          # one-time weight layout prep (off hot path)

    fwd = jax.jit(functools.partial(lenet_forward, num_classes=10))
    out = jax.block_until_ready(fwd(x, prep))
    assert out.shape == (2, 10), out.shape
    assert out.dtype == jnp.float32

    # Sanity check vs pure-JAX reference (bf16 MXU operands -> loose tolerance).
    ref = jax.block_until_ready(lenet_reference(x, params))
    np.testing.assert_allclose(np.asarray(out), np.asarray(ref), rtol=5e-2, atol=5e-2)

    print("KERNEL_OK")
</pallas_src>

<mosaic_0001>
module attributes {stable_mosaic.version = 11 : i64} {
  func.func @_matmul_bias_act_kernel(%arg0: i32, %arg1: memref<392x128xbf16, #tpu.memory_space<vmem>>, %arg2: memref<128x128xbf16, #tpu.memory_space<vmem>>, %arg3: memref<1x128xf32, #tpu.memory_space<vmem>>, %arg4: memref<392x128xf32, #tpu.memory_space<vmem>>) attributes {dimension_semantics = [#tpu.dimension_semantics<parallel>], iteration_bounds = array<i64: 4>, scalar_prefetch = 0 : i64, scratch_operands = 0 : i64, tpu.core_type = #tpu.core_type<tc>, window_params = [{transform_indices = @transform_0, window_bounds = array<i64: 392, 128>}, {pipeline_mode = #tpu.pipeline_mode<synchronous>, transform_indices = @transform_1, window_bounds = array<i64: 128, 128>}, {pipeline_mode = #tpu.pipeline_mode<synchronous>, transform_indices = @transform_2, window_bounds = array<i64: 1, 128>}, {transform_indices = @transform_3, window_bounds = array<i64: 392, 128>}]} {
    %c0 = arith.constant 0 : index
    %c0_0 = arith.constant 0 : index
    %0 = vector.load %arg1[%c0, %c0_0] : memref<392x128xbf16, #tpu.memory_space<vmem>>, vector<392x128xbf16>
    %c0_1 = arith.constant 0 : index
    %c0_2 = arith.constant 0 : index
    %1 = vector.load %arg2[%c0_1, %c0_2] : memref<128x128xbf16, #tpu.memory_space<vmem>>, vector<128x128xbf16>
    %cst = arith.constant dense<0.000000e+00> : vector<392x128xf32>
    %2 = tpu.matmul %0, %1, %cst {dimension_numbers = #tpu.dot_dimension_numbers<[1], [0], [0], [1], [0, 0, 1, 1], [], []>} : vector<392x128xbf16>, vector<128x128xbf16>, vector<392x128xf32> -> vector<392x128xf32>
    %c0_3 = arith.constant 0 : index
    %c0_4 = arith.constant 0 : index
    %3 = vector.load %arg3[%c0_3, %c0_4] : memref<1x128xf32, #tpu.memory_space<vmem>>, vector<1x128xf32>
    %4 = vector.broadcast %3 : vector<1x128xf32> to vector<392x128xf32>
    %5 = arith.addf %2, %4 : vector<392x128xf32>
    %cst_5 = arith.constant 0.000000e+00 : f32
    %6 = vector.broadcast %cst_5 : f32 to vector<392x128xf32>
    %7 = arith.maximumf %5, %6 : vector<392x128xf32>
    %c0_6 = arith.constant 0 : index
    %c0_7 = arith.constant 0 : index
    %8 = vector.load %arg4[%c0_6, %c0_7] : memref<392x128xf32, #tpu.memory_space<vmem>>, vector<392x128xf32>
    tpu.vector_store %arg4[%c0_6, %c0_7], %7 {strides = array<i32>} : memref<392x128xf32, #tpu.memory_space<vmem>>, vector<392x128xf32>,
    return
  }
  func.func @transform_0(%arg0: i32) -> (i32, i32) {
    %c0_i32 = arith.constant 0 : i32
    %c0_i32_0 = arith.constant 0 : i32
    return %arg0, %c0_i32 : i32, i32
  }
  func.func @transform_1(%arg0: i32) -> (i32, i32) {
    %c0_i32 = arith.constant 0 : i32
    %c0_i32_0 = arith.constant 0 : i32
    %c0_i32_1 = arith.constant 0 : i32
    return %c0_i32, %c0_i32_0 : i32, i32
  }
  func.func @transform_2(%arg0: i32) -> (i32, i32) {
    %c0_i32 = arith.constant 0 : i32
    %c0_i32_0 = arith.constant 0 : i32
    %c0_i32_1 = arith.constant 0 : i32
    return %c0_i32, %c0_i32_0 : i32, i32
  }
  func.func @transform_3(%arg0: i32) -> (i32, i32) {
    %c0_i32 = arith.constant 0 : i32
    %c0_i32_0 = arith.constant 0 : i32
    return %arg0, %c0_i32 : i32, i32
  }
}

module attributes {stable_mosaic.version = 11 : i64} {
  func.func @_maxpool_reduce_kernel(%arg0: i32, %arg1: memref<4x392x128xf32, #tpu.memory_space<vmem>>, %arg2: memref<392x128xf32, #tpu.memory_space<vmem>>) attributes {dimension_semantics = [#tpu.dimension_semantics<parallel>], iteration_bounds = array<i64: 1>, scalar_prefetch = 0 : i64, scratch_operands = 0 : i64, tpu.core_type = #tpu.core_type<tc>, window_params = [{transform_indices = @transform_0, window_bounds = array<i64: 4, 392, 128>}, {transform_indices = @transform_1, window_bounds = array<i64: 392, 128>}]} {
    %c0 = arith.constant 0 : index
    %c0_0 = arith.constant 0 : index
    %c0_1 = arith.constant 0 : index
    %0 = vector.load %arg1[%c0, %c0_0, %c0_1] : memref<4x392x128xf32, #tpu.memory_space<vmem>>, vector<4x392x128xf32>
    %cst = arith.constant dense<0xFF800000> : vector<392x128xf32>
    %1 = vector.multi_reduction <maximumf>, %0, %cst [0] : vector<4x392x128xf32> to vector<392x128xf32>
    %c0_2 = arith.constant 0 : index
    %c0_3 = arith.constant 0 : index
    %2 = vector.load %arg2[%c0_2, %c0_3] : memref<392x128xf32, #tpu.memory_space<vmem>>, vector<392x128xf32>
    tpu.vector_store %arg2[%c0_2, %c0_3], %1 {strides = array<i32>} : memref<392x128xf32, #tpu.memory_space<vmem>>, vector<392x128xf32>,
    return
  }
  func.func @transform_0(%arg0: i32) -> (i32, i32, i32) {
    %c0_i32 = arith.constant 0 : i32
    %c0_i32_0 = arith.constant 0 : i32
    %c0_i32_1 = arith.constant 0 : i32
    return %c0_i32, %arg0, %c0_i32_0 : i32, i32, i32
  }
  func.func @transform_1(%arg0: i32) -> (i32, i32) {
    %c0_i32 = arith.constant 0 : i32
    %c0_i32_0 = arith.constant 0 : i32
    return %arg0, %c0_i32 : i32, i32
  }
}

module attributes {stable_mosaic.version = 11 : i64} {
  func.func @_matmul_bias_act_kernel(%arg0: i32, %arg1: memref<200x256xbf16, #tpu.memory_space<vmem>>, %arg2: memref<256x128xbf16, #tpu.memory_space<vmem>>, %arg3: memref<1x128xf32, #tpu.memory_space<vmem>>, %arg4: memref<200x128xf32, #tpu.memory_space<vmem>>) attributes {dimension_semantics = [#tpu.dimension_semantics<parallel>], iteration_bounds = array<i64: 1>, scalar_prefetch = 0 : i64, scratch_operands = 0 : i64, tpu.core_type = #tpu.core_type<tc>, window_params = [{transform_indices = @transform_0, window_bounds = array<i64: 200, 256>}, {pipeline_mode = #tpu.pipeline_mode<synchronous>, transform_indices = @transform_1, window_bounds = array<i64: 256, 128>}, {pipeline_mode = #tpu.pipeline_mode<synchronous>, transform_indices = @transform_2, window_bounds = array<i64: 1, 128>}, {transform_indices = @transform_3, window_bounds = array<i64: 200, 128>}]} {
    %c0 = arith.constant 0 : index
    %c0_0 = arith.constant 0 : index
    %0 = vector.load %arg1[%c0, %c0_0] : memref<200x256xbf16, #tpu.memory_space<vmem>>, vector<200x256xbf16>
    %c0_1 = arith.constant 0 : index
    %c0_2 = arith.constant 0 : index
    %1 = vector.load %arg2[%c0_1, %c0_2] : memref<256x128xbf16, #tpu.memory_space<vmem>>, vector<256x128xbf16>
    %cst = arith.constant dense<0.000000e+00> : vector<200x128xf32>
    %2 = tpu.matmul %0, %1, %cst {dimension_numbers = #tpu.dot_dimension_numbers<[1], [0], [0], [1], [0, 0, 1, 1], [], []>} : vector<200x256xbf16>, vector<256x128xbf16>, vector<200x128xf32> -> vector<200x128xf32>
    %c0_3 = arith.constant 0 : index
    %c0_4 = arith.constant 0 : index
    %3 = vector.load %arg3[%c0_3, %c0_4] : memref<1x128xf32, #tpu.memory_space<vmem>>, vector<1x128xf32>
    %4 = vector.broadcast %3 : vector<1x128xf32> to vector<200x128xf32>
    %5 = arith.addf %2, %4 : vector<200x128xf32>
    %cst_5 = arith.constant 0.000000e+00 : f32
    %6 = vector.broadcast %cst_5 : f32 to vector<200x128xf32>
    %7 = arith.maximumf %5, %6 : vector<200x128xf32>
    %c0_6 = arith.constant 0 : index
    %c0_7 = arith.constant 0 : index
    %8 = vector.load %arg4[%c0_6, %c0_7] : memref<200x128xf32, #tpu.memory_space<vmem>>, vector<200x128xf32>
    tpu.vector_store %arg4[%c0_6, %c0_7], %7 {strides = array<i32>} : memref<200x128xf32, #tpu.memory_space<vmem>>, vector<200x128xf32>,
    return
  }
  func.func @transform_0(%arg0: i32) -> (i32, i32) {
    %c0_i32 = arith.constant 0 : i32
    %c0_i32_0 = arith.constant 0 : i32
    return %arg0, %c0_i32 : i32, i32
  }
  func.func @transform_1(%arg0: i32) -> (i32, i32) {
    %c0_i32 = arith.constant 0 : i32
    %c0_i32_0 = arith.constant 0 : i32
    %c0_i32_1 = arith.constant 0 : i32
    return %c0_i32, %c0_i32_0 : i32, i32
  }
  func.func @transform_2(%arg0: i32) -> (i32, i32) {
    %c0_i32 = arith.constant 0 : i32
    %c0_i32_0 = arith.constant 0 : i32
    %c0_i32_1 = arith.constant 0 : i32
    return %c0_i32, %c0_i32_0 : i32, i32
  }
  func.func @transform_3(%arg0: i32) -> (i32, i32) {
    %c0_i32 = arith.constant 0 : i32
    %c0_i32_0 = arith.constant 0 : i32
    return %arg0, %c0_i32 : i32, i32
  }
}

module attributes {stable_mosaic.version = 11 : i64} {
  func.func @_maxpool_reduce_kernel(%arg0: i32, %arg1: memref<4x56x128xf32, #tpu.memory_space<vmem>>, %arg2: memref<56x128xf32, #tpu.memory_space<vmem>>) attributes {dimension_semantics = [#tpu.dimension_semantics<parallel>], iteration_bounds = array<i64: 1>, scalar_prefetch = 0 : i64, scratch_operands = 0 : i64, tpu.core_type = #tpu.core_type<tc>, window_params = [{transform_indices = @transform_0, window_bounds = array<i64: 4, 56, 128>}, {transform_indices = @transform_1, window_bounds = array<i64: 56, 128>}]} {
    %c0 = arith.constant 0 : index
    %c0_0 = arith.constant 0 : index
    %c0_1 = arith.constant 0 : index
    %0 = vector.load %arg1[%c0, %c0_0, %c0_1] : memref<4x56x128xf32, #tpu.memory_space<vmem>>, vector<4x56x128xf32>
    %cst = arith.constant dense<0xFF800000> : vector<56x128xf32>
    %1 = vector.multi_reduction <maximumf>, %0, %cst [0] : vector<4x56x128xf32> to vector<56x128xf32>
    %c0_2 = arith.constant 0 : index
    %c0_3 = arith.constant 0 : index
    %2 = vector.load %arg2[%c0_2, %c0_3] : memref<56x128xf32, #tpu.memory_space<vmem>>, vector<56x128xf32>
    tpu.vector_store %arg2[%c0_2, %c0_3], %1 {strides = array<i32>} : memref<56x128xf32, #tpu.memory_space<vmem>>, vector<56x128xf32>,
    return
  }
  func.func @transform_0(%arg0: i32) -> (i32, i32, i32) {
    %c0_i32 = arith.constant 0 : i32
    %c0_i32_0 = arith.constant 0 : i32
    %c0_i32_1 = arith.constant 0 : i32
    return %c0_i32, %arg0, %c0_i32_0 : i32, i32, i32
  }
  func.func @transform_1(%arg0: i32) -> (i32, i32) {
    %c0_i32 = arith.constant 0 : i32
    %c0_i32_0 = arith.constant 0 : i32
    return %arg0, %c0_i32 : i32, i32
  }
}

module attributes {stable_mosaic.version = 11 : i64} {
  func.func @_fc_chain_kernel(%arg0: i32, %arg1: memref<8x512xbf16, #tpu.memory_space<vmem>>, %arg2: memref<512x128xbf16, #tpu.memory_space<vmem>>, %arg3: memref<1x128xf32, #tpu.memory_space<vmem>>, %arg4: memref<128x128xbf16, #tpu.memory_space<vmem>>, %arg5: memref<1x128xf32, #tpu.memory_space<vmem>>, %arg6: memref<128x128xbf16, #tpu.memory_space<vmem>>, %arg7: memref<1x128xf32, #tpu.memory_space<vmem>>, %arg8: memref<8x128xf32, #tpu.memory_space<vmem>>) attributes {dimension_semantics = [#tpu.dimension_semantics<parallel>], iteration_bounds = array<i64: 1>, scalar_prefetch = 0 : i64, scratch_operands = 0 : i64, tpu.core_type = #tpu.core_type<tc>, window_params = [{transform_indices = @transform_0, window_bounds = array<i64: 8, 512>}, {pipeline_mode = #tpu.pipeline_mode<synchronous>, transform_indices = @transform_1, window_bounds = array<i64: 512, 128>}, {pipeline_mode = #tpu.pipeline_mode<synchronous>, transform_indices = @transform_2, window_bounds = array<i64: 1, 128>}, {pipeline_mode = #tpu.pipeline_mode<synchronous>, transform_indices = @transform_3, window_bounds = array<i64: 128, 128>}, {pipeline_mode = #tpu.pipeline_mode<synchronous>, transform_indices = @transform_4, window_bounds = array<i64: 1, 128>}, {pipeline_mode = #tpu.pipeline_mode<synchronous>, transform_indices = @transform_5, window_bounds = array<i64: 128, 128>}, {pipeline_mode = #tpu.pipeline_mode<synchronous>, transform_indices = @transform_6, window_bounds = array<i64: 1, 128>}, {transform_indices = @transform_7, window_bounds = array<i64: 8, 128>}]} {
    %c0 = arith.constant 0 : index
    %c0_0 = arith.constant 0 : index
    %0 = vector.load %arg1[%c0, %c0_0] : memref<8x512xbf16, #tpu.memory_space<vmem>>, vector<8x512xbf16>
    %c0_1 = arith.constant 0 : index
    %c0_2 = arith.constant 0 : index
    %1 = vector.load %arg2[%c0_1, %c0_2] : memref<512x128xbf16, #tpu.memory_space<vmem>>, vector<512x128xbf16>
    %cst = arith.constant dense<0.000000e+00> : vector<8x128xf32>
    %2 = tpu.matmul %0, %1, %cst {dimension_numbers = #tpu.dot_dimension_numbers<[1], [0], [0], [1], [0, 0, 1, 1], [], []>} : vector<8x512xbf16>, vector<512x128xbf16>, vector<8x128xf32> -> vector<8x128xf32>
    %c0_3 = arith.constant 0 : index
    %c0_4 = arith.constant 0 : index
    %3 = vector.load %arg3[%c0_3, %c0_4] : memref<1x128xf32, #tpu.memory_space<vmem>>, vector<1x128xf32>
    %4 = vector.broadcast %3 : vector<1x128xf32> to vector<8x128xf32>
    %5 = arith.addf %2, %4 : vector<8x128xf32>
    %cst_5 = arith.constant 0.000000e+00 : f32
    %6 = vector.broadcast %cst_5 : f32 to vector<8x128xf32>
    %7 = arith.maximumf %5, %6 : vector<8x128xf32>
    %8 = arith.truncf %7 : vector<8x128xf32> to vector<8x128xbf16>
    %c0_6 = arith.constant 0 : index
    %c0_7 = arith.constant 0 : index
    %9 = vector.load %arg4[%c0_6, %c0_7] : memref<128x128xbf16, #tpu.memory_space<vmem>>, vector<128x128xbf16>
    %cst_8 = arith.constant dense<0.000000e+00> : vector<8x128xf32>
    %10 = tpu.matmul %8, %9, %cst_8 {dimension_numbers = #tpu.dot_dimension_numbers<[1], [0], [0], [1], [0, 0, 1, 1], [], []>} : vector<8x128xbf16>, vector<128x128xbf16>, vector<8x128xf32> -> vector<8x128xf32>
    %c0_9 = arith.constant 0 : index
    %c0_10 = arith.constant 0 : index
    %11 = vector.load %arg5[%c0_9, %c0_10] : memref<1x128xf32, #tpu.memory_space<vmem>>, vector<1x128xf32>
    %12 = vector.broadcast %11 : vector<1x128xf32> to vector<8x128xf32>
    %13 = arith.addf %10, %12 : vector<8x128xf32>
    %cst_11 = arith.constant 0.000000e+00 : f32
    %14 = vector.broadcast %cst_11 : f32 to vector<8x128xf32>
    %15 = arith.maximumf %13, %14 : vector<8x128xf32>
    %16 = arith.truncf %15 : vector<8x128xf32> to vector<8x128xbf16>
    %c0_12 = arith.constant 0 : index
    %c0_13 = arith.constant 0 : index
    %17 = vector.load %arg6[%c0_12, %c0_13] : memref<128x128xbf16, #tpu.memory_space<vmem>>, vector<128x128xbf16>
    %cst_14 = arith.constant dense<0.000000e+00> : vector<8x128xf32>
    %18 = tpu.matmul %16, %17, %cst_14 {dimension_numbers = #tpu.dot_dimension_numbers<[1], [0], [0], [1], [0, 0, 1, 1], [], []>} : vector<8x128xbf16>, vector<128x128xbf16>, vector<8x128xf32> -> vector<8x128xf32>
    %c0_15 = arith.constant 0 : index
    %c0_16 = arith.constant 0 : index
    %19 = vector.load %arg7[%c0_15, %c0_16] : memref<1x128xf32, #tpu.memory_space<vmem>>, vector<1x128xf32>
    %20 = vector.broadcast %19 : vector<1x128xf32> to vector<8x128xf32>
    %21 = arith.addf %18, %20 : vector<8x128xf32>
    %c0_17 = arith.constant 0 : index
    %c0_18 = arith.constant 0 : index
    %22 = vector.load %arg8[%c0_17, %c0_18] : memref<8x128xf32, #tpu.memory_space<vmem>>, vector<8x128xf32>
    tpu.vector_store %arg8[%c0_17, %c0_18], %21 {strides = array<i32>} : memref<8x128xf32, #tpu.memory_space<vmem>>, vector<8x128xf32>,
    return
  }
  func.func @transform_0(%arg0: i32) -> (i32, i32) {
    %c0_i32 = arith.constant 0 : i32
    %c0_i32_0 = arith.constant 0 : i32
    return %arg0, %c0_i32 : i32, i32
  }
  func.func @transform_1(%arg0: i32) -> (i32, i32) {
    %c0_i32 = arith.constant 0 : i32
    %c0_i32_0 = arith.constant 0 : i32
    %c0_i32_1 = arith.constant 0 : i32
    return %c0_i32, %c0_i32_0 : i32, i32
  }
  func.func @transform_2(%arg0: i32) -> (i32, i32) {
    %c0_i32 = arith.constant 0 : i32
    %c0_i32_0 = arith.constant 0 : i32
    %c0_i32_1 = arith.constant 0 : i32
    return %c0_i32, %c0_i32_0 : i32, i32
  }
  func.func @transform_3(%arg0: i32) -> (i32, i32) {
    %c0_i32 = arith.constant 0 : i32
    %c0_i32_0 = arith.constant 0 : i32
    %c0_i32_1 = arith.constant 0 : i32
    return %c0_i32, %c0_i32_0 : i32, i32
  }
  func.func @transform_4(%arg0: i32) -> (i32, i32) {
    %c0_i32 = arith.constant 0 : i32
    %c0_i32_0 = arith.constant 0 : i32
    %c0_i32_1 = arith.constant 0 : i32
    return %c0_i32, %c0_i32_0 : i32, i32
  }
  func.func @transform_5(%arg0: i32) -> (i32, i32) {
    %c0_i32 = arith.constant 0 : i32
    %c0_i32_0 = arith.constant 0 : i32
    %c0_i32_1 = arith.constant 0 : i32
    return %c0_i32, %c0_i32_0 : i32, i32
  }
  func.func @transform_6(%arg0: i32) -> (i32, i32) {
    %c0_i32 = arith.constant 0 : i32
    %c0_i32_0 = arith.constant 0 : i32
    %c0_i32_1 = arith.constant 0 : i32
    return %c0_i32, %c0_i32_0 : i32, i32
  }
  func.func @transform_7(%arg0: i32) -> (i32, i32) {
    %c0_i32 = arith.constant 0 : i32
    %c0_i32_0 = arith.constant 0 : i32
    return %arg0, %c0_i32 : i32, i32
  }
}

</mosaic_0001>

<llo_original>
// kernel: lenet_forward.5
$region0: #{lenet_forward.5}
  #allocation0 [shape = 'u32[]', space=smem, size = 0x4, offset = 0x4, fixed_abs, tag = 'smem constant byte address 0x4 - core index']
  #allocation1 [shape = 'u32[144,128]{1,0:T(1,128)}', space=vmem, size = 0x12000, scoped, tag = 'internal scratch']
  %s0 = inlined_call_operand.vmem [shape: bf16[1568,128], index: 0, kind: input, shape index: {}]
  %s1 = inlined_call_operand.vmem [shape: bf16[128,128], index: 1, kind: input, shape index: {}]
  %s2 = inlined_call_operand.vmem [shape: f32[1,128], index: 2, kind: input, shape index: {}]
  %s3 = inlined_call_operand.vmem [shape: f32[1568,128], index: 3, kind: output, shape index: {}]
  %s4 = sld [smem:[#allocation0]]
  $region45: #{lenet_forward.5} parent=0
    _
  %s6 = ssub.s32 1, %s4
  %s7 = scalar_select 0, %s6, %s4
  loop: start=0, step=1, limit=6
  $region2: #{lenet_forward.5} parent=0 // loop_pre_header
    _
  $region3: #{lenet_forward.5} parent=0 // loop_header
    %s9 = sphi 0, %s13
    %p10 = scmp.ge.s32.totalorder %s9, 6
    %s19 = sphi 0, %s21
    %s22 = sphi 0, %s19
    %s23 = sphi 0, %s22
    %s39 = sphi 0, %s23
    %s43 = sphi 0, %s43
    %s45 = sphi 0, %s43
    %s46 = sphi 0, %s45
    %s60 = sphi 0, %s46
    %s64 = sphi 0, %s64
    %s66 = sphi 0, %s64
    %s67 = sphi 0, %s66
    %s81 = sphi 0, %s67
    %s87 = sphi 0, %s89
    %s90 = sphi 0, %s87
    %s91 = sphi 0, %s90
    %s107 = sphi 0, %s91
  $region4: #{lenet_forward.5} parent=0 // loop_header_branch
    %12 = sbr.rel (%p10) target = $region8
  $region5: #{lenet_forward.5} parent=0 // loop_body
    %s14 = ssub.s32 %s9, 1
    %s15 = ssub.s32 %s9, 2
    %s16 = sadd.s32 %s9, 1
    %s17 = ssub.s32 %s9, %s16
    %p18 = scmp.eq.s32.totalorder %s17, 0
    %s20 = sadd.s32 %s19, 1
    %s21 = scalar_select %p18, %s19, %s20
    %p24 = pneg %p18
    %p25 = scmp.eq.s32.totalorder %s9, 3
    %p26 = por %p24, %p25
    %p27 = scmp.ne.s32.totalorder %s19, %s22
    %p28 = scmp.eq.s32.totalorder %s9, 0
    %p29 = por %p27, %p28
    %p30 = scmp.ne.s32.totalorder %s19, %s22
    %p31 = scmp.eq.s32.totalorder %s14, 3
    %p32 = por %p30, %p31
    %p33 = scmp.ne.s32.totalorder %s22, %s23
    %p34 = scmp.eq.s32.totalorder %s14, 0
    %p35 = por %p33, %p34
    %p36 = scmp.ne.s32.totalorder %s22, %s23
    %p37 = scmp.eq.s32.totalorder %s15, 3
    %p38 = por %p36, %p37
    %p40 = scmp.ne.s32.totalorder %s23, %s39
    %p41 = scmp.eq.s32.totalorder %s15, 0
    %p42 = por %p40, %p41
    %s44 = sadd.s32 %s43, 1
    %p47 = scmp.eq.s32.totalorder %s9, 3
    %p48 = scmp.ne.s32.totalorder %s43, %s45
    %p49 = scmp.eq.s32.totalorder %s9, 0
    %p50 = por %p48, %p49
    %p51 = scmp.ne.s32.totalorder %s43, %s45
    %p52 = scmp.eq.s32.totalorder %s14, 3
    %p53 = por %p51, %p52
    %p54 = scmp.ne.s32.totalorder %s45, %s46
    %p55 = scmp.eq.s32.totalorder %s14, 0
    %p56 = por %p54, %p55
    %p57 = scmp.ne.s32.totalorder %s45, %s46
    %p58 = scmp.eq.s32.totalorder %s15, 3
    %p59 = por %p57, %p58
    %p61 = scmp.ne.s32.totalorder %s46, %s60
    %p62 = scmp.eq.s32.totalorder %s15, 0
    %p63 = por %p61, %p62
    %s65 = sadd.s32 %s64, 1
    %p68 = scmp.eq.s32.totalorder %s9, 3
    %p69 = scmp.ne.s32.totalorder %s64, %s66
    %p70 = scmp.eq.s32.totalorder %s9, 0
    %p71 = por %p69, %p70
    %p72 = scmp.ne.s32.totalorder %s64, %s66
    %p73 = scmp.eq.s32.totalorder %s14, 3
    %p74 = por %p72, %p73
    %p75 = scmp.ne.s32.totalorder %s66, %s67
    %p76 = scmp.eq.s32.totalorder %s14, 0
    %p77 = por %p75, %p76
    %p78 = scmp.ne.s32.totalorder %s66, %s67
    %p79 = scmp.eq.s32.totalorder %s15, 3
    %p80 = por %p78, %p79
    %p82 = scmp.ne.s32.totalorder %s67, %s81
    %p83 = scmp.eq.s32.totalorder %s15, 0
    %p84 = por %p82, %p83
    %s85 = ssub.s32 %s9, %s16
    %p86 = scmp.eq.s32.totalorder %s85, 0
    %s88 = sadd.s32 %s87, 1
    %s89 = scalar_select %p86, %s87, %s88
    %p92 = pneg %p86
    %p93 = scmp.eq.s32.totalorder %s9, 3
    %p94 = por %p92, %p93
    %p95 = scmp.ne.s32.totalorder %s87, %s90
    %p96 = scmp.eq.s32.totalorder %s9, 0
    %p97 = por %p95, %p96
    %p98 = scmp.ne.s32.totalorder %s87, %s90
    %p99 = scmp.eq.s32.totalorder %s14, 3
    %p100 = por %p98, %p99
    %p101 = scmp.ne.s32.totalorder %s90, %s91
    %p102 = scmp.eq.s32.totalorder %s14, 0
    %p103 = por %p101, %p102
    %p104 = scmp.ne.s32.totalorder %s90, %s91
    %p105 = scmp.eq.s32.totalorder %s15, 3
    %p106 = por %p104, %p105
    %p108 = scmp.ne.s32.totalorder %s91, %s107
    %p109 = scmp.eq.s32.totalorder %s15, 0
    %p110 = por %p108, %p109
    %p111 = scmp.le.s32.totalorder 1, %s9
    %p112 = scmp.lt.s32.totalorder %s9, 5
    %p113 = pnand %p111, %p112
    %p114 = pneg %p113
    // Predicated region
    $region9: #{lenet_forward.5} parent=5 // pred_check
      _
    $region10: #{lenet_forward.5} parent=5 // pred_check_branch
      %116 = sbr.rel (%p113) target = $region12
    $region11: #{lenet_forward.5} parent=5 // pred_region
      %s117 = ssub.s32 %s9, 1
      // Predicated region
      $region13: #{lenet_forward.5} parent=11 // pred_check
        %p118 = pneg %p56
      $region14: #{lenet_forward.5} parent=11 // pred_check_branch
        %120 = sbr.rel (%p118) target = $region16
      $region15: #{lenet_forward.5} parent=11 // pred_region
        _
      $region16: #{lenet_forward.5} parent=11 // pred_fallthru
        _
      // Predicated region
      $region17: #{lenet_forward.5} parent=11 // pred_check
        %p121 = pneg %p77
      $region18: #{lenet_forward.5} parent=11 // pred_check_branch
        %123 = sbr.rel (%p121) target = $region20
      $region19: #{lenet_forward.5} parent=11 // pred_region
        _
      $region20: #{lenet_forward.5} parent=11 // pred_fallthru
        _
    $region12: #{lenet_forward.5} parent=5 // pred_fallthru
      _
    %p124 = scmp.lt.s32.totalorder %s9, 4
    // Predicated region
    $region21: #{lenet_forward.5} parent=5 // pred_check
      %p125 = pneg %p124
    $region22: #{lenet_forward.5} parent=5 // pred_check_branch
      %127 = sbr.rel (%p125) target = $region24
    $region23: #{lenet_forward.5} parent=5 // pred_region
      // Predicated region
      $region25: #{lenet_forward.5} parent=23 // pred_check
        %p128 = pneg %p29
      $region26: #{lenet_forward.5} parent=23 // pred_check_branch
        %130 = sbr.rel (%p128) target = $region28
      $region27: #{lenet_forward.5} parent=23 // pred_region
        %s131 = smul.u32 49, %s9
        %p132 = scmp.lt.s32.totalorder %s131, 195
        %s133 = scalar_select %p132, %s131, 195
        %s134 = smul.addr %s133, 4
        %s135 = scalar_lea.vmem %s0, %s134
        %s136 = smul.u32 49, %s9
      $region28: #{lenet_forward.5} parent=23 // pred_fallthru
        _
    $region24: #{lenet_forward.5} parent=5 // pred_fallthru
      _
    %p137 = scmp.le.s32.totalorder 1, %s9
    %p138 = scmp.lt.s32.totalorder %s9, 5
    %p139 = pnand %p137, %p138
    %p140 = pneg %p139
    // Predicated region
    $region29: #{lenet_forward.5} parent=5 // pred_check
      _
    $region30: #{lenet_forward.5} parent=5 // pred_check_branch
      %142 = sbr.rel (%p139) target = $region32
    $region31: #{lenet_forward.5} parent=5 // pred_region
      %s143 = ssub.s32 %s9, 1
      %s144 = smul.u32 49, %s14
      %p145 = scmp.lt.s32.totalorder %s144, 195
      %s146 = scalar_select %p145, %s144, 195
      %s147 = smul.addr %s146, 4
      %s148 = scalar_lea.vmem %s0, %s147
      %p149 = pneg %p35
      %p150 = pneg %p32
      %p151 = pneg %p56
      %p152 = pneg %p53
      %p153 = pneg %p77
      %p154 = pneg %p74
      %p155 = pneg %p103
      %p156 = pneg %p100
      %s157 = smul.u32 49, %s14
      %p158 = scmp.lt.s32.totalorder %s157, 195
      %s159 = scalar_select %p158, %s157, 195
      %s160 = smul.addr %s159, 8
      %s161 = scalar_lea.vmem %s3, %s160
      %s162 = smul.u32 49, %s14
      %p163 = scmp.lt.s32.totalorder %s162, 195
      %s164 = scalar_select %p163, %s162, 195
      %s165 = smul.addr %s164, 4
      %s166 = scalar_lea.vmem %s0, %s165
      %s167 = smul.u32 49, %s14
      %s168 = smul.u32 49, %s14
      %p169 = scmp.lt.s32.totalorder %s168, 195
      %s170 = scalar_select %p169, %s168, 195
      %s171 = smul.addr %s170, 8
      %s172 = scalar_lea.vmem %s3, %s171
      %s173 = smul.u32 49, %s14
      %v175 = vld [vmem:[%s166] sm:$0xf]
      %v176 = vld [vmem:[%s166 + $0x4] sm:$0xf]
      %v177 = vld [vmem:[%s166 + $0x8] sm:$0xf]
      %v178 = vld [vmem:[%s166 + $0xc] sm:$0xf]
      %v179 = vld [vmem:[%s166 + $0x10] sm:$0xf]
      %v180 = vld [vmem:[%s166 + $0x14] sm:$0xf]
      %v181 = vld [vmem:[%s166 + $0x18] sm:$0xf]
      %v182 = vld [vmem:[%s166 + $0x1c] sm:$0xf]
      %v183 = vld [vmem:[%s166 + $0x20] sm:$0xf]
      %v184 = vld [vmem:[%s166 + $0x24] sm:$0xf]
      %v185 = vld [vmem:[%s166 + $0x28] sm:$0xf]
      %v186 = vld [vmem:[%s166 + $0x2c] sm:$0xf]
      %v187 = vld [vmem:[%s166 + $0x30] sm:$0xf]
      %v188 = vld [vmem:[%s166 + $0x34] sm:$0xf]
      %v189 = vld [vmem:[%s166 + $0x38] sm:$0xf]
      %v190 = vld [vmem:[%s166 + $0x3c] sm:$0xf]
      %v191 = vld [vmem:[%s166 + $0x40] sm:$0xf]
      %v192 = vld [vmem:[%s166 + $0x44] sm:$0xf]
      %v193 = vld [vmem:[%s166 + $0x48] sm:$0xf]
      %v194 = vld [vmem:[%s166 + $0x4c] sm:$0xf]
      %v195 = vld [vmem:[%s166 + $0x50] sm:$0xf]
      %v196 = vld [vmem:[%s166 + $0x54] sm:$0xf]
      %v197 = vld [vmem:[%s166 + $0x58] sm:$0xf]
      %v198 = vld [vmem:[%s166 + $0x5c] sm:$0xf]
      %v199 = vld [vmem:[%s166 + $0x60] sm:$0xf]
      %v200 = vld [vmem:[%s166 + $0x64] sm:$0xf]
      %v201 = vld [vmem:[%s166 + $0x68] sm:$0xf]
      %v202 = vld [vmem:[%s166 + $0x6c] sm:$0xf]
      %v203 = vld [vmem:[%s166 + $0x70] sm:$0xf]
      %v204 = vld [vmem:[%s166 + $0x74] sm:$0xf]
      %v205 = vld [vmem:[%s166 + $0x78] sm:$0xf]
      %v206 = vld [vmem:[%s166 + $0x7c] sm:$0xf]
      %v207 = vld [vmem:[%s166 + $0x80] sm:$0xf]
      %v208 = vld [vmem:[%s166 + $0x84] sm:$0xf]
      %v209 = vld [vmem:[%s166 + $0x88] sm:$0xf]
      %v210 = vld [vmem:[%s166 + $0x8c] sm:$0xf]
      %v211 = vld [vmem:[%s166 + $0x90] sm:$0xf]
      %v212 = vld [vmem:[%s166 + $0x94] sm:$0xf]
      %v213 = vld [vmem:[%s166 + $0x98] sm:$0xf]
      %v214 = vld [vmem:[%s166 + $0x9c] sm:$0xf]
      %v215 = vld [vmem:[%s166 + $0xa0] sm:$0xf]
      %v216 = vld [vmem:[%s166 + $0xa4] sm:$0xf]
      %v217 = vld [vmem:[%s166 + $0xa8] sm:$0xf]
      %v218 = vld [vmem:[%s166 + $0xac] sm:$0xf]
      %v219 = vld [vmem:[%s166 + $0xb0] sm:$0xf]
      %v220 = vld [vmem:[%s166 + $0xb4] sm:$0xf]
      %v221 = vld [vmem:[%s166 + $0xb8] sm:$0xf]
      %v222 = vld [vmem:[%s166 + $0xbc] sm:$0xf]
      %v223 = vld [vmem:[%s166 + $0xc0] sm:$0xf]
      %v224 = vld [vmem:[%s1] sm:$0xf]
      %v225 = vld [vmem:[%s1 + $0x4] sm:$0xf]
      %v226 = vld [vmem:[%s1 + $0x8] sm:$0xf]
      %v227 = vld [vmem:[%s1 + $0xc] sm:$0xf]
      %v228 = vld [vmem:[%s1 + $0x10] sm:$0xf]
      %v229 = vld [vmem:[%s1 + $0x14] sm:$0xf]
      %v230 = vld [vmem:[%s1 + $0x18] sm:$0xf]
      %v231 = vld [vmem:[%s1 + $0x1c] sm:$0xf]
      %v232 = vld [vmem:[%s1 + $0x20] sm:$0xf]
      %v233 = vld [vmem:[%s1 + $0x24] sm:$0xf]
      %v234 = vld [vmem:[%s1 + $0x28] sm:$0xf]
      %v235 = vld [vmem:[%s1 + $0x2c] sm:$0xf]
      %v236 = vld [vmem:[%s1 + $0x30] sm:$0xf]
      %v237 = vld [vmem:[%s1 + $0x34] sm:$0xf]
      %v238 = vld [vmem:[%s1 + $0x38] sm:$0xf]
      %v239 = vld [vmem:[%s1 + $0x3c] sm:$0xf]
      %v240 = vld [vmem:[%s2] sm:$0x1]
      %v242 = vlaneseq
      %v243 = vshrl.u32 %v242, 7
      %v244 = vsub.s32 0, %v243
      %v245 = vrot.slane %v240, %v244
      %v296 = vunpack.c.l.b16 %v175
      %v297 = vunpack.c.l.b16 %v176
      %v298 = vunpack.c.l.b16 %v177
      %v299 = vunpack.c.l.b16 %v178
      %v300 = vunpack.c.l.b16 %v179
      %v301 = vunpack.c.l.b16 %v180
      %v302 = vunpack.c.l.b16 %v181
      %v303 = vunpack.c.l.b16 %v182
      %v304 = vunpack.c.l.b16 %v183
      %v305 = vunpack.c.l.b16 %v184
      %v306 = vunpack.c.l.b16 %v185
      %v307 = vunpack.c.l.b16 %v186
      %v308 = vunpack.c.l.b16 %v187
      %v309 = vunpack.c.l.b16 %v188
      %v310 = vunpack.c.l.b16 %v189
      %v311 = vunpack.c.l.b16 %v190
      %v312 = vunpack.c.l.b16 %v191
      %v313 = vunpack.c.l.b16 %v192
      %v314 = vunpack.c.l.b16 %v193
      %v315 = vunpack.c.l.b16 %v194
      %v316 = vunpack.c.l.b16 %v195
      %v317 = vunpack.c.l.b16 %v196
      %v318 = vunpack.c.l.b16 %v197
      %v319 = vunpack.c.l.b16 %v198
      %v320 = vunpack.c.l.b16 %v199
      %v321 = vunpack.c.l.b16 %v200
      %v322 = vunpack.c.l.b16 %v201
      %v323 = vunpack.c.l.b16 %v202
      %v324 = vunpack.c.l.b16 %v203
      %v325 = vunpack.c.l.b16 %v204
      %v326 = vunpack.c.l.b16 %v205
      %v327 = vunpack.c.l.b16 %v206
      %v328 = vunpack.c.l.b16 %v207
      %v329 = vunpack.c.l.b16 %v208
      %v330 = vunpack.c.l.b16 %v209
      %v331 = vunpack.c.l.b16 %v210
      %v332 = vunpack.c.l.b16 %v211
      %v333 = vunpack.c.l.b16 %v212
      %v334 = vunpack.c.l.b16 %v213
      %v335 = vunpack.c.l.b16 %v214
      %v336 = vunpack.c.l.b16 %v215
      %v337 = vunpack.c.l.b16 %v216
      %v338 = vunpack.c.l.b16 %v217
      %v339 = vunpack.c.l.b16 %v218
      %v340 = vunpack.c.l.b16 %v219
      %v341 = vunpack.c.l.b16 %v220
      %v342 = vunpack.c.l.b16 %v221
      %v343 = vunpack.c.l.b16 %v222
      %v344 = vunpack.c.l.b16 %v223
      %v345 = vpack.c.b16 %v297, %v296
      %v346 = vpack.c.b16 %v299, %v298
      %v347 = vpack.c.b16 %v301, %v300
      %v348 = vpack.c.b16 %v303, %v302
      %v349 = vpack.c.b16 %v305, %v304
      %v350 = vpack.c.b16 %v307, %v306
      %v351 = vpack.c.b16 %v309, %v308
      %v352 = vpack.c.b16 %v311, %v310
      %v353 = vpack.c.b16 %v313, %v312
      %v354 = vpack.c.b16 %v315, %v314
      %v355 = vpack.c.b16 %v317, %v316
      %v356 = vpack.c.b16 %v319, %v318
      %v357 = vpack.c.b16 %v321, %v320
      %v358 = vpack.c.b16 %v323, %v322
      %v359 = vpack.c.b16 %v325, %v324
      %v360 = vpack.c.b16 %v327, %v326
      %v361 = vpack.c.b16 %v329, %v328
      %v362 = vpack.c.b16 %v331, %v330
      %v363 = vpack.c.b16 %v333, %v332
      %v364 = vpack.c.b16 %v335, %v334
      %v365 = vpack.c.b16 %v337, %v336
      %v366 = vpack.c.b16 %v339, %v338
      %v367 = vpack.c.b16 %v341, %v340
      %v368 = vpack.c.b16 %v343, %v342
      %v369 = vpack.c.b16 %v344, %v344
      %v411 = vunpack.c.l.b16 %v224
      %v412 = vunpack.c.l.b16 %v225
      %v413 = vunpack.c.l.b16 %v226
      %v414 = vunpack.c.l.b16 %v227
      %v415 = vunpack.c.l.b16 %v228
      %v416 = vunpack.c.l.b16 %v229
      %v417 = vunpack.c.l.b16 %v230
      %v418 = vunpack.c.l.b16 %v231
      %v419 = vunpack.c.l.b16 %v232
      %v420 = vunpack.c.l.b16 %v233
      %v421 = vunpack.c.l.b16 %v234
      %v422 = vunpack.c.l.b16 %v235
      %v423 = vunpack.c.l.b16 %v236
      %v424 = vunpack.c.l.b16 %v237
      %v425 = vunpack.c.l.b16 %v238
      %v426 = vunpack.c.l.b16 %v239
      %v427 = vpack.c.b16 %v412, %v411
      %v428 = vpack.c.b16 %v414, %v413
      %v429 = vpack.c.b16 %v416, %v415
      %v430 = vpack.c.b16 %v418, %v417
      %v431 = vpack.c.b16 %v420, %v419
      %v432 = vpack.c.b16 %v422, %v421
      %v433 = vpack.c.b16 %v424, %v423
      %v434 = vpack.c.b16 %v426, %v425
      %443 = vmatprep.subr.bf16.mxu0 0
      %444 = vmatpush1.bf16.msra.mxu0 %v427
      %445 = vmatprep.subr.bf16.mxu0 0
      %446 = vmatpush1.bf16.msra.mxu0 %v428
      %447 = vmatprep.subr.bf16.mxu0 0
      %448 = vmatpush1.bf16.msra.mxu0 %v429
      %449 = vmatprep.subr.bf16.mxu0 0
      %450 = vmatpush1.bf16.msra.mxu0 %v430
      %451 = vmatprep.subr.bf16.mxu0 0
      %452 = vmatpush1.bf16.msra.mxu0 %v431
      %453 = vmatprep.subr.bf16.mxu0 0
      %454 = vmatpush1.bf16.msra.mxu0 %v432
      %455 = vmatprep.subr.bf16.mxu0 0
      %456 = vmatpush1.bf16.msra.mxu0 %v433
      %457 = vmatprep.subr.bf16.mxu0 0
      %458 = vmatpush1.bf16.msra.mxu0 %v434
      %459 = vmatprep.subr.bf16.mxu0 0
      %460 = vmatpush1.bf16.msra.mxu0 0
      %461 = vmatprep.subr.bf16.mxu0 0
      %462 = vmatpush1.bf16.msra.mxu0 0
      %463 = vmatprep.subr.bf16.mxu0 0
      %464 = vmatpush1.bf16.msra.mxu0 0
      %465 = vmatprep.subr.bf16.mxu0 0
      %466 = vmatpush1.bf16.msra.mxu0 0
      %467 = vmatprep.subr.bf16.mxu0 0
      %468 = vmatpush1.bf16.msra.mxu0 0
      %469 = vmatprep.subr.bf16.mxu0 0
      %470 = vmatpush1.bf16.msra.mxu0 0
      %471 = vmatprep.subr.bf16.mxu0 0
      %472 = vmatpush1.bf16.msra.mxu0 0
      %473 = vmatprep.subr.bf16.mxu0 0
      %474 = vmatpush1.bf16.msra.mxu0 0
      %475 = vmatprep.mubr.bf16.mxu0 0
      %476 = vmatmul.mubr.bf16.gmra.mrb[0].mxu0 %v345
      %v477 = vpop.f32.mrb[0].mxu0
      %v478 = vadd.f32 %v245, %v477
      %v479 = vpop.f32.mrb[0].mxu0
      %v480 = vpop.f32.mrb[0].mxu0
      %v481 = vadd.f32 %v245, %v480
      %v482 = vpop.f32.mrb[0].mxu0
      %483 = vmatprep.mubr.bf16.mxu0 0
      %484 = vmatmul.mubr.bf16.gmra.mrb[0].mxu0 %v346
      %v485 = vpop.f32.mrb[0].mxu0
      %v486 = vadd.f32 %v245, %v485
      %v487 = vpop.f32.mrb[0].mxu0
      %v488 = vpop.f32.mrb[0].mxu0
      %v489 = vadd.f32 %v245, %v488
      %v490 = vpop.f32.mrb[0].mxu0
      %491 = vmatprep.mubr.bf16.mxu0 0
      %492 = vmatmul.mubr.bf16.gmra.mrb[0].mxu0 %v347
      %v493 = vpop.f32.mrb[0].mxu0
      %v494 = vadd.f32 %v245, %v493
      %v495 = vpop.f32.mrb[0].mxu0
      %v496 = vpop.f32.mrb[0].mxu0
      %v497 = vadd.f32 %v245, %v496
      %v498 = vpop.f32.mrb[0].mxu0
      %499 = vmatprep.mubr.bf16.mxu0 0
      %500 = vmatmul.mubr.bf16.gmra.mrb[0].mxu0 %v348
      %v501 = vpop.f32.mrb[0].mxu0
      %v502 = vadd.f32 %v245, %v501
      %v503 = vpop.f32.mrb[0].mxu0
      %v504 = vpop.f32.mrb[0].mxu0
      %v505 = vadd.f32 %v245, %v504
      %v506 = vpop.f32.mrb[0].mxu0
      %507 = vmatprep.mubr.bf16.mxu0 0
      %508 = vmatmul.mubr.bf16.gmra.mrb[0].mxu0 %v349
      %v509 = vpop.f32.mrb[0].mxu0
      %v510 = vadd.f32 %v245, %v509
      %v511 = vpop.f32.mrb[0].mxu0
      %v512 = vpop.f32.mrb[0].mxu0
      %v513 = vadd.f32 %v245, %v512
      %v514 = vpop.f32.mrb[0].mxu0
      %515 = vmatprep.mubr.bf16.mxu0 0
      %516 = vmatmul.mubr.bf16.gmra.mrb[0].mxu0 %v350
      %v517 = vpop.f32.mrb[0].mxu0
      %v518 = vadd.f32 %v245, %v517
      %v519 = vpop.f32.mrb[0].mxu0
      %v520 = vpop.f32.mrb[0].mxu0
      %v521 = vadd.f32 %v245, %v520
      %v522 = vpop.f32.mrb[0].mxu0
      %523 = vmatprep.mubr.bf16.mxu0 0
      %524 = vmatmul.mubr.bf16.gmra.mrb[0].mxu0 %v351
      %v525 = vpop.f32.mrb[0].mxu0
      %v526 = vadd.f32 %v245, %v525
      %v527 = vpop.f32.mrb[0].mxu0
      %v528 = vpop.f32.mrb[0].mxu0
      %v529 = vadd.f32 %v245, %v528
      %v530 = vpop.f32.mrb[0].mxu0
      %531 = vmatprep.mubr.bf16.mxu0 0
      %532 = vmatmul.mubr.bf16.gmra.mrb[0].mxu0 %v352
      %v533 = vpop.f32.mrb[0].mxu0
      %v534 = vadd.f32 %v245, %v533
      %v535 = vpop.f32.mrb[0].mxu0
      %v536 = vpop.f32.mrb[0].mxu0
      %v537 = vadd.f32 %v245, %v536
      %v538 = vpop.f32.mrb[0].mxu0
      %539 = vmatprep.mubr.bf16.mxu0 0
      %540 = vmatmul.mubr.bf16.gmra.mrb[0].mxu0 %v353
      %v541 = vpop.f32.mrb[0].mxu0
      %v542 = vadd.f32 %v245, %v541
      %v543 = vpop.f32.mrb[0].mxu0
      %v544 = vpop.f32.mrb[0].mxu0
      %v545 = vadd.f32 %v245, %v544
      %v546 = vpop.f32.mrb[0].mxu0
      %547 = vmatprep.mubr.bf16.mxu0 0
      %548 = vmatmul.mubr.bf16.gmra.mrb[0].mxu0 %v354
      %v549 = vpop.f32.mrb[0].mxu0
      %v550 = vadd.f32 %v245, %v549
      %v551 = vpop.f32.mrb[0].mxu0
      %v552 = vpop.f32.mrb[0].mxu0
      %v553 = vadd.f32 %v245, %v552
      %v554 = vpop.f32.mrb[0].mxu0
      %555 = vmatprep.mubr.bf16.mxu0 0
      %556 = vmatmul.mubr.bf16.gmra.mrb[0].mxu0 %v355
      %v557 = vpop.f32.mrb[0].mxu0
      %v558 = vadd.f32 %v245, %v557
      %v559 = vpop.f32.mrb[0].mxu0
      %v560 = vpop.f32.mrb[0].mxu0
      %v561 = vadd.f32 %v245, %v560
      %v562 = vpop.f32.mrb[0].mxu0
      %563 = vmatprep.mubr.bf16.mxu0 0
      %564 = vmatmul.mubr.bf16.gmra.mrb[0].mxu0 %v356
      %v565 = vpop.f32.mrb[0].mxu0
      %v566 = vadd.f32 %v245, %v565
      %v567 = vpop.f32.mrb[0].mxu0
      %v568 = vpop.f32.mrb[0].mxu0
      %v569 = vadd.f32 %v245, %v568
      %v570 = vpop.f32.mrb[0].mxu0
      %571 = vmatprep.mubr.bf16.mxu0 0
      %572 = vmatmul.mubr.bf16.gmra.mrb[0].mxu0 %v357
      %v573 = vpop.f32.mrb[0].mxu0
      %v574 = vadd.f32 %v245, %v573
      %v575 = vpop.f32.mrb[0].mxu0
      %v576 = vpop.f32.mrb[0].mxu0
      %v577 = vadd.f32 %v245, %v576
      %v578 = vpop.f32.mrb[0].mxu0
      %579 = vmatprep.mubr.bf16.mxu0 0
      %580 = vmatmul.mubr.bf16.gmra.mrb[0].mxu0 %v358
      %v581 = vpop.f32.mrb[0].mxu0
      %v582 = vadd.f32 %v245, %v581
      %v583 = vpop.f32.mrb[0].mxu0
      %v584 = vpop.f32.mrb[0].mxu0
      %v585 = vadd.f32 %v245, %v584
      %v586 = vpop.f32.mrb[0].mxu0
      %587 = vmatprep.mubr.bf16.mxu0 0
      %588 = vmatmul.mubr.bf16.gmra.mrb[0].mxu0 %v359
      %v589 = vpop.f32.mrb[0].mxu0
      %v590 = vadd.f32 %v245, %v589
      %v591 = vpop.f32.mrb[0].mxu0
      %v592 = vpop.f32.mrb[0].mxu0
      %v593 = vadd.f32 %v245, %v592
      %v594 = vpop.f32.mrb[0].mxu0
      %595 = vmatprep.mubr.bf16.mxu0 0
      %596 = vmatmul.mubr.bf16.gmra.mrb[0].mxu0 %v360
      %v597 = vpop.f32.mrb[0].mxu0
      %v598 = vadd.f32 %v245, %v597
      %v599 = vpop.f32.mrb[0].mxu0
      %v600 = vpop.f32.mrb[0].mxu0
      %v601 = vadd.f32 %v245, %v600
      %v602 = vpop.f32.mrb[0].mxu0
      %603 = vmatprep.mubr.bf16.mxu0 0
      %604 = vmatmul.mubr.bf16.gmra.mrb[0].mxu0 %v361
      %v605 = vpop.f32.mrb[0].mxu0
      %v606 = vadd.f32 %v245, %v605
      %v607 = vpop.f32.mrb[0].mxu0
      %v608 = vpop.f32.mrb[0].mxu0
      %v609 = vadd.f32 %v245, %v608
      %v610 = vpop.f32.mrb[0].mxu0
      %611 = vmatprep.mubr.bf16.mxu0 0
      %612 = vmatmul.mubr.bf16.gmra.mrb[0].mxu0 %v362
      %v613 = vpop.f32.mrb[0].mxu0
      %v614 = vadd.f32 %v245, %v613
      %v615 = vpop.f32.mrb[0].mxu0
      %v616 = vpop.f32.mrb[0].mxu0
      %v617 = vadd.f32 %v245, %v616
      %v618 = vpop.f32.mrb[0].mxu0
      %619 = vmatprep.mubr.bf16.mxu0 0
      %620 = vmatmul.mubr.bf16.gmra.mrb[0].mxu0 %v363
      %v621 = vpop.f32.mrb[0].mxu0
      %v622 = vadd.f32 %v245, %v621
      %v623 = vpop.f32.mrb[0].mxu0
      %v624 = vpop.f32.mrb[0].mxu0
      %v625 = vadd.f32 %v245, %v624
      %v626 = vpop.f32.mrb[0].mxu0
      %627 = vmatprep.mubr.bf16.mxu0 0
      %628 = vmatmul.mubr.bf16.gmra.mrb[0].mxu0 %v364
      %v629 = vpop.f32.mrb[0].mxu0
      %v630 = vadd.f32 %v245, %v629
      %v631 = vpop.f32.mrb[0].mxu0
      %v632 = vpop.f32.mrb[0].mxu0
      %v633 = vadd.f32 %v245, %v632
      %v634 = vpop.f32.mrb[0].mxu0
      %635 = vmatprep.mubr.bf16.mxu0 0
      %636 = vmatmul.mubr.bf16.gmra.mrb[0].mxu0 %v365
      %v637 = vpop.f32.mrb[0].mxu0
      %v638 = vadd.f32 %v245, %v637
      %v639 = vpop.f32.mrb[0].mxu0
      %v640 = vpop.f32.mrb[0].mxu0
      %v641 = vadd.f32 %v245, %v640
      %v642 = vpop.f32.mrb[0].mxu0
      %643 = vmatprep.mubr.bf16.mxu0 0
      %644 = vmatmul.mubr.bf16.gmra.mrb[0].mxu0 %v366
      %v645 = vpop.f32.mrb[0].mxu0
      %v646 = vadd.f32 %v245, %v645
      %v647 = vpop.f32.mrb[0].mxu0
      %v648 = vpop.f32.mrb[0].mxu0
      %v649 = vadd.f32 %v245, %v648
      %v650 = vpop.f32.mrb[0].mxu0
      %651 = vmatprep.mubr.bf16.mxu0 0
      %652 = vmatmul.mubr.bf16.gmra.mrb[0].mxu0 %v367
      %v653 = vpop.f32.mrb[0].mxu0
      %v654 = vadd.f32 %v245, %v653
      %v655 = vpop.f32.mrb[0].mxu0
      %v656 = vpop.f32.mrb[0].mxu0
      %v657 = vadd.f32 %v245, %v656
      %v658 = vpop.f32.mrb[0].mxu0
      %659 = vmatprep.mubr.bf16.mxu0 0
      %660 = vmatmul.mubr.bf16.gmra.mrb[0].mxu0 %v368
      %v661 = vpop.f32.mrb[0].mxu0
      %v662 = vadd.f32 %v245, %v661
      %v663 = vpop.f32.mrb[0].mxu0
      %v664 = vpop.f32.mrb[0].mxu0
      %v665 = vadd.f32 %v245, %v664
      %v666 = vpop.f32.mrb[0].mxu0
      %667 = vmatprep.mubr.bf16.mxu0 0
      %668 = vmatmul.mubr.bf16.gmra.mrb[0].mxu0 %v369
      %v669 = vpop.f32.mrb[0].mxu0
      %v670 = vadd.f32 %v245, %v669
      %v671 = vpop.f32.mrb[0].mxu0
      %v672 = vpop.f32.mrb[0].mxu0
      %v673 = vpop.f32.mrb[0].mxu0
      %674 = vdwg.mxu0
      %v675 = vmax.f32 %v478, 0.0
      %v676 = vmax.f32 %v481, 0.0
      %v677 = vmax.f32 %v486, 0.0
      %v678 = vmax.f32 %v489, 0.0
      %v679 = vmax.f32 %v494, 0.0
      %v680 = vmax.f32 %v497, 0.0
      %v681 = vmax.f32 %v502, 0.0
      %v682 = vmax.f32 %v505, 0.0
      %v683 = vmax.f32 %v510, 0.0
      %v684 = vmax.f32 %v513, 0.0
      %v685 = vmax.f32 %v518, 0.0
      %v686 = vmax.f32 %v521, 0.0
      %v687 = vmax.f32 %v526, 0.0
      %v688 = vmax.f32 %v529, 0.0
      %v689 = vmax.f32 %v534, 0.0
      %v690 = vmax.f32 %v537, 0.0
      %v691 = vmax.f32 %v542, 0.0
      %v692 = vmax.f32 %v545, 0.0
      %v693 = vmax.f32 %v550, 0.0
      %v694 = vmax.f32 %v553, 0.0
      %v695 = vmax.f32 %v558, 0.0
      %v696 = vmax.f32 %v561, 0.0
      %v697 = vmax.f32 %v566, 0.0
      %v698 = vmax.f32 %v569, 0.0
      %v699 = vmax.f32 %v574, 0.0
      %v700 = vmax.f32 %v577, 0.0
      %v701 = vmax.f32 %v582, 0.0
      %v702 = vmax.f32 %v585, 0.0
      %v703 = vmax.f32 %v590, 0.0
      %v704 = vmax.f32 %v593, 0.0
      %v705 = vmax.f32 %v598, 0.0
      %v706 = vmax.f32 %v601, 0.0
      %v707 = vmax.f32 %v606, 0.0
      %v708 = vmax.f32 %v609, 0.0
      %v709 = vmax.f32 %v614, 0.0
      %v710 = vmax.f32 %v617, 0.0
      %v711 = vmax.f32 %v622, 0.0
      %v712 = vmax.f32 %v625, 0.0
      %v713 = vmax.f32 %v630, 0.0
      %v714 = vmax.f32 %v633, 0.0
      %v715 = vmax.f32 %v638, 0.0
      %v716 = vmax.f32 %v641, 0.0
      %v717 = vmax.f32 %v646, 0.0
      %v718 = vmax.f32 %v649, 0.0
      %v719 = vmax.f32 %v654, 0.0
      %v720 = vmax.f32 %v657, 0.0
      %v721 = vmax.f32 %v662, 0.0
      %v722 = vmax.f32 %v665, 0.0
      %v723 = vmax.f32 %v670, 0.0
      %724 = vst [vmem:[%s172] sm:$0xff] %v675
      %725 = vst [vmem:[%s172 + $0x8] sm:$0xff] %v676
      %726 = vst [vmem:[%s172 + $0x10] sm:$0xff] %v677
      %727 = vst [vmem:[%s172 + $0x18] sm:$0xff] %v678
      %728 = vst [vmem:[%s172 + $0x20] sm:$0xff] %v679
      %729 = vst [vmem:[%s172 + $0x28] sm:$0xff] %v680
      %730 = vst [vmem:[%s172 + $0x30] sm:$0xff] %v681
      %731 = vst [vmem:[%s172 + $0x38] sm:$0xff] %v682
      %732 = vst [vmem:[%s172 + $0x40] sm:$0xff] %v683
      %733 = vst [vmem:[%s172 + $0x48] sm:$0xff] %v684
      %734 = vst [vmem:[%s172 + $0x50] sm:$0xff] %v685
      %735 = vst [vmem:[%s172 + $0x58] sm:$0xff] %v686
      %736 = vst [vmem:[%s172 + $0x60] sm:$0xff] %v687
      %737 = vst [vmem:[%s172 + $0x68] sm:$0xff] %v688
      %738 = vst [vmem:[%s172 + $0x70] sm:$0xff] %v689
      %739 = vst [vmem:[%s172 + $0x78] sm:$0xff] %v690
      %740 = vst [vmem:[%s172 + $0x80] sm:$0xff] %v691
      %741 = vst [vmem:[%s172 + $0x88] sm:$0xff] %v692
      %742 = vst [vmem:[%s172 + $0x90] sm:$0xff] %v693
      %743 = vst [vmem:[%s172 + $0x98] sm:$0xff] %v694
      %744 = vst [vmem:[%s172 + $0xa0] sm:$0xff] %v695
      %745 = vst [vmem:[%s172 + $0xa8] sm:$0xff] %v696
      %746 = vst [vmem:[%s172 + $0xb0] sm:$0xff] %v697
      %747 = vst [vmem:[%s172 + $0xb8] sm:$0xff] %v698
      %748 = vst [vmem:[%s172 + $0xc0] sm:$0xff] %v699
      %749 = vst [vmem:[%s172 + $0xc8] sm:$0xff] %v700
      %750 = vst [vmem:[%s172 + $0xd0] sm:$0xff] %v701
      %751 = vst [vmem:[%s172 + $0xd8] sm:$0xff] %v702
      %752 = vst [vmem:[%s172 + $0xe0] sm:$0xff] %v703
      %753 = vst [vmem:[%s172 + $0xe8] sm:$0xff] %v704
      %754 = vst [vmem:[%s172 + $0xf0] sm:$0xff] %v705
      %755 = vst [vmem:[%s172 + $0xf8] sm:$0xff] %v706
      %756 = vst [vmem:[%s172 + $0x100] sm:$0xff] %v707
      %757 = vst [vmem:[%s172 + $0x108] sm:$0xff] %v708
      %758 = vst [vmem:[%s172 + $0x110] sm:$0xff] %v709
      %759 = vst [vmem:[%s172 + $0x118] sm:$0xff] %v710
      %760 = vst [vmem:[%s172 + $0x120] sm:$0xff] %v711
      %761 = vst [vmem:[%s172 + $0x128] sm:$0xff] %v712
      %762 = vst [vmem:[%s172 + $0x130] sm:$0xff] %v713
      %763 = vst [vmem:[%s172 + $0x138] sm:$0xff] %v714
      %764 = vst [vmem:[%s172 + $0x140] sm:$0xff] %v715
      %765 = vst [vmem:[%s172 + $0x148] sm:$0xff] %v716
      %766 = vst [vmem:[%s172 + $0x150] sm:$0xff] %v717
      %767 = vst [vmem:[%s172 + $0x158] sm:$0xff] %v718
      %768 = vst [vmem:[%s172 + $0x160] sm:$0xff] %v719
      %769 = vst [vmem:[%s172 + $0x168] sm:$0xff] %v720
      %770 = vst [vmem:[%s172 + $0x170] sm:$0xff] %v721
      %771 = vst [vmem:[%s172 + $0x178] sm:$0xff] %v722
      %772 = vst [vmem:[%s172 + $0x180] sm:$0xff] %v723
      %s773 = smul.u32 49, %s14
      %p774 = scmp.lt.s32.totalorder %s773, 195
      %s775 = scalar_select %p774, %s773, 195
      %s776 = smul.addr %s775, 8
      %s777 = scalar_lea.vmem %s3, %s776
      // Predicated region
      $region33: #{lenet_forward.5} parent=31 // pred_check
        %p778 = pneg %p100
      $region34: #{lenet_forward.5} parent=31 // pred_check_branch
        %780 = sbr.rel (%p778) target = $region36
      $region35: #{lenet_forward.5} parent=31 // pred_region
        %s781 = smul.u32 49, %s14
      $region36: #{lenet_forward.5} parent=31 // pred_fallthru
        _
    $region32: #{lenet_forward.5} parent=5 // pred_fallthru
      _
    %p782 = scmp.le.s32.totalorder 2, %s9
    // Predicated region
    $region37: #{lenet_forward.5} parent=5 // pred_check
      %p783 = pneg %p782
    $region38: #{lenet_forward.5} parent=5 // pred_check_branch
      %785 = sbr.rel (%p783) target = $region40
    $region39: #{lenet_forward.5} parent=5 // pred_region
      %s786 = ssub.s32 %s9, 2
      // Predicated region
      $region41: #{lenet_forward.5} parent=39 // pred_check
        %p787 = pneg %p106
      $region42: #{lenet_forward.5} parent=39 // pred_check_branch
        %789 = sbr.rel (%p787) target = $region44
      $region43: #{lenet_forward.5} parent=39 // pred_region
        %s790 = smul.u32 49, %s15
        %p791 = scmp.lt.s32.totalorder %s790, 195
        %s792 = scalar_select %p791, %s790, 195
        %s793 = smul.addr %s792, 8
        %s794 = scalar_lea.vmem %s3, %s793
      $region44: #{lenet_forward.5} parent=39 // pred_fallthru
        _
    $region40: #{lenet_forward.5} parent=5 // pred_fallthru
      _
  $region6: #{lenet_forward.5} parent=0 // loop_footer
    %s13 = sadd.s32 1, %s9
  $region7: #{lenet_forward.5} parent=0 // loop_footer_branch
    %8 = sbr.rel target = $region3
  $region8: #{lenet_forward.5} parent=0 // loop_exit
    _

// kernel: lenet_forward.6
$region0: #{lenet_forward.6}
  #allocation0 [shape = 'u32[]', space=smem, size = 0x4, offset = 0x4, fixed_abs, tag = 'smem constant byte address 0x4 - core index']
  #allocation1 [shape = 'u32[144,128]{1,0:T(1,128)}', space=vmem, size = 0x12000, scoped, tag = 'internal scratch']
  %s0 = inlined_call_operand.vmem [shape: f32[4,392,128], index: 0, kind: input, shape index: {}]
  %s1 = inlined_call_operand.vmem [shape: f32[392,128], index: 1, kind: output, shape index: {}]
  %s2 = sld [smem:[#allocation0]]
  $region14: #{lenet_forward.6} parent=0
    _
  %s4 = ssub.s32 1, %s2
  %s5 = scalar_select 0, %s4, %s2
  // Predicated region
  $region2: #{lenet_forward.6} parent=0 // pred_check
    _
  $region3: #{lenet_forward.6} parent=0 // pred_check_branch
    %7 = sbr.rel (0) target = $region5
  $region4: #{lenet_forward.6} parent=0 // pred_region
    _
  $region5: #{lenet_forward.6} parent=0 // pred_fallthru
    _
  %v8 = vld [vmem:[%s0] sm:$0xff]
  %v9 = vld [vmem:[%s0 + $0x8] sm:$0xff]
  %v10 = vld [vmem:[%s0 + $0x10] sm:$0xff]
  %v11 = vld [vmem:[%s0 + $0x18] sm:$0xff]
  %v12 = vld [vmem:[%s0 + $0x20] sm:$0xff]
  %v13 = vld [vmem:[%s0 + $0x28] sm:$0xff]
  %v14 = vld [vmem:[%s0 + $0x30] sm:$0xff]
  %v15 = vld [vmem:[%s0 + $0x38] sm:$0xff]
  %v16 = vld [vmem:[%s0 + $0x40] sm:$0xff]
  %v17 = vld [vmem:[%s0 + $0x48] sm:$0xff]
  %v18 = vld [vmem:[%s0 + $0x50] sm:$0xff]
  %v19 = vld [vmem:[%s0 + $0x58] sm:$0xff]
  %v20 = vld [vmem:[%s0 + $0x60] sm:$0xff]
  %v21 = vld [vmem:[%s0 + $0x68] sm:$0xff]
  %v22 = vld [vmem:[%s0 + $0x70] sm:$0xff]
  %v23 = vld [vmem:[%s0 + $0x78] sm:$0xff]
  %v24 = vld [vmem:[%s0 + $0x80] sm:$0xff]
  %v25 = vld [vmem:[%s0 + $0x88] sm:$0xff]
  %v26 = vld [vmem:[%s0 + $0x90] sm:$0xff]
  %v27 = vld [vmem:[%s0 + $0x98] sm:$0xff]
  %v28 = vld [vmem:[%s0 + $0xa0] sm:$0xff]
  %v29 = vld [vmem:[%s0 + $0xa8] sm:$0xff]
  %v30 = vld [vmem:[%s0 + $0xb0] sm:$0xff]
  %v31 = vld [vmem:[%s0 + $0xb8] sm:$0xff]
  %v32 = vld [vmem:[%s0 + $0xc0] sm:$0xff]
  %v33 = vld [vmem:[%s0 + $0xc8] sm:$0xff]
  %v34 = vld [vmem:[%s0 + $0xd0] sm:$0xff]
  %v35 = vld [vmem:[%s0 + $0xd8] sm:$0xff]
  %v36 = vld [vmem:[%s0 + $0xe0] sm:$0xff]
  %v37 = vld [vmem:[%s0 + $0xe8] sm:$0xff]
  %v38 = vld [vmem:[%s0 + $0xf0] sm:$0xff]
  %v39 = vld [vmem:[%s0 + $0xf8] sm:$0xff]
  %v40 = vld [vmem:[%s0 + $0x100] sm:$0xff]
  %v41 = vld [vmem:[%s0 + $0x108] sm:$0xff]
  %v42 = vld [vmem:[%s0 + $0x110] sm:$0xff]
  %v43 = vld [vmem:[%s0 + $0x118] sm:$0xff]
  %v44 = vld [vmem:[%s0 + $0x120] sm:$0xff]
  %v45 = vld [vmem:[%s0 + $0x128] sm:$0xff]
  %v46 = vld [vmem:[%s0 + $0x130] sm:$0xff]
  %v47 = vld [vmem:[%s0 + $0x138] sm:$0xff]
  %v48 = vld [vmem:[%s0 + $0x140] sm:$0xff]
  %v49 = vld [vmem:[%s0 + $0x148] sm:$0xff]
  %v50 = vld [vmem:[%s0 + $0x150] sm:$0xff]
  %v51 = vld [vmem:[%s0 + $0x158] sm:$0xff]
  %v52 = vld [vmem:[%s0 + $0x160] sm:$0xff]
  %v53 = vld [vmem:[%s0 + $0x168] sm:$0xff]
  %v54 = vld [vmem:[%s0 + $0x170] sm:$0xff]
  %v55 = vld [vmem:[%s0 + $0x178] sm:$0xff]
  %v56 = vld [vmem:[%s0 + $0x180] sm:$0xff]
  %v57 = vld [vmem:[%s0 + $0x188] sm:$0xff]
  %v58 = vld [vmem:[%s0 + $0x190] sm:$0xff]
  %v59 = vld [vmem:[%s0 + $0x198] sm:$0xff]
  %v60 = vld [vmem:[%s0 + $0x1a0] sm:$0xff]
  %v61 = vld [vmem:[%s0 + $0x1a8] sm:$0xff]
  %v62 = vld [vmem:[%s0 + $0x1b0] sm:$0xff]
  %v63 = vld [vmem:[%s0 + $0x1b8] sm:$0xff]
  %v64 = vld [vmem:[%s0 + $0x1c0] sm:$0xff]
  %v65 = vld [vmem:[%s0 + $0x1c8] sm:$0xff]
  %v66 = vld [vmem:[%s0 + $0x1d0] sm:$0xff]
  %v67 = vld [vmem:[%s0 + $0x1d8] sm:$0xff]
  %v68 = vld [vmem:[%s0 + $0x1e0] sm:$0xff]
  %v69 = vld [vmem:[%s0 + $0x1e8] sm:$0xff]
  %v70 = vld [vmem:[%s0 + $0x1f0] sm:$0xff]
  %v71 = vld [vmem:[%s0 + $0x1f8] sm:$0xff]
  %v72 = vld [vmem:[%s0 + $0x200] sm:$0xff]
  %v73 = vld [vmem:[%s0 + $0x208] sm:$0xff]
  %v74 = vld [vmem:[%s0 + $0x210] sm:$0xff]
  %v75 = vld [vmem:[%s0 + $0x218] sm:$0xff]
  %v76 = vld [vmem:[%s0 + $0x220] sm:$0xff]
  %v77 = vld [vmem:[%s0 + $0x228] sm:$0xff]
  %v78 = vld [vmem:[%s0 + $0x230] sm:$0xff]
  %v79 = vld [vmem:[%s0 + $0x238] sm:$0xff]
  %v80 = vld [vmem:[%s0 + $0x240] sm:$0xff]
  %v81 = vld [vmem:[%s0 + $0x248] sm:$0xff]
  %v82 = vld [vmem:[%s0 + $0x250] sm:$0xff]
  %v83 = vld [vmem:[%s0 + $0x258] sm:$0xff]
  %v84 = vld [vmem:[%s0 + $0x260] sm:$0xff]
  %v85 = vld [vmem:[%s0 + $0x268] sm:$0xff]
  %v86 = vld [vmem:[%s0 + $0x270] sm:$0xff]
  %v87 = vld [vmem:[%s0 + $0x278] sm:$0xff]
  %v88 = vld [vmem:[%s0 + $0x280] sm:$0xff]
  %v89 = vld [vmem:[%s0 + $0x288] sm:$0xff]
  %v90 = vld [vmem:[%s0 + $0x290] sm:$0xff]
  %v91 = vld [vmem:[%s0 + $0x298] sm:$0xff]
  %v92 = vld [vmem:[%s0 + $0x2a0] sm:$0xff]
  %v93 = vld [vmem:[%s0 + $0x2a8] sm:$0xff]
  %v94 = vld [vmem:[%s0 + $0x2b0] sm:$0xff]
  %v95 = vld [vmem:[%s0 + $0x2b8] sm:$0xff]
  %v96 = vld [vmem:[%s0 + $0x2c0] sm:$0xff]
  %v97 = vld [vmem:[%s0 + $0x2c8] sm:$0xff]
  %v98 = vld [vmem:[%s0 + $0x2d0] sm:$0xff]
  %v99 = vld [vmem:[%s0 + $0x2d8] sm:$0xff]
  %v100 = vld [vmem:[%s0 + $0x2e0] sm:$0xff]
  %v101 = vld [vmem:[%s0 + $0x2e8] sm:$0xff]
  %v102 = vld [vmem:[%s0 + $0x2f0] sm:$0xff]
  %v103 = vld [vmem:[%s0 + $0x2f8] sm:$0xff]
  %v104 = vld [vmem:[%s0 + $0x300] sm:$0xff]
  %v105 = vld [vmem:[%s0 + $0x308] sm:$0xff]
  %v106 = vld [vmem:[%s0 + $0x310] sm:$0xff]
  %v107 = vld [vmem:[%s0 + $0x318] sm:$0xff]
  %v108 = vld [vmem:[%s0 + $0x320] sm:$0xff]
  %v109 = vld [vmem:[%s0 + $0x328] sm:$0xff]
  %v110 = vld [vmem:[%s0 + $0x330] sm:$0xff]
  %v111 = vld [vmem:[%s0 + $0x338] sm:$0xff]
  %v112 = vld [vmem:[%s0 + $0x340] sm:$0xff]
  %v113 = vld [vmem:[%s0 + $0x348] sm:$0xff]
  %v114 = vld [vmem:[%s0 + $0x350] sm:$0xff]
  %v115 = vld [vmem:[%s0 + $0x358] sm:$0xff]
  %v116 = vld [vmem:[%s0 + $0x360] sm:$0xff]
  %v117 = vld [vmem:[%s0 + $0x368] sm:$0xff]
  %v118 = vld [vmem:[%s0 + $0x370] sm:$0xff]
  %v119 = vld [vmem:[%s0 + $0x378] sm:$0xff]
  %v120 = vld [vmem:[%s0 + $0x380] sm:$0xff]
  %v121 = vld [vmem:[%s0 + $0x388] sm:$0xff]
  %v122 = vld [vmem:[%s0 + $0x390] sm:$0xff]
  %v123 = vld [vmem:[%s0 + $0x398] sm:$0xff]
  %v124 = vld [vmem:[%s0 + $0x3a0] sm:$0xff]
  %v125 = vld [vmem:[%s0 + $0x3a8] sm:$0xff]
  %v126 = vld [vmem:[%s0 + $0x3b0] sm:$0xff]
  %v127 = vld [vmem:[%s0 + $0x3b8] sm:$0xff]
  %v128 = vld [vmem:[%s0 + $0x3c0] sm:$0xff]
  %v129 = vld [vmem:[%s0 + $0x3c8] sm:$0xff]
  %v130 = vld [vmem:[%s0 + $0x3d0] sm:$0xff]
  %v131 = vld [vmem:[%s0 + $0x3d8] sm:$0xff]
  %v132 = vld [vmem:[%s0 + $0x3e0] sm:$0xff]
  %v133 = vld [vmem:[%s0 + $0x3e8] sm:$0xff]
  %v134 = vld [vmem:[%s0 + $0x3f0] sm:$0xff]
  %v135 = vld [vmem:[%s0 + $0x3f8] sm:$0xff]
  %v136 = vld [vmem:[%s0 + $0x400] sm:$0xff]
  %v137 = vld [vmem:[%s0 + $0x408] sm:$0xff]
  %v138 = vld [vmem:[%s0 + $0x410] sm:$0xff]
  %v139 = vld [vmem:[%s0 + $0x418] sm:$0xff]
  %v140 = vld [vmem:[%s0 + $0x420] sm:$0xff]
  %v141 = vld [vmem:[%s0 + $0x428] sm:$0xff]
  %v142 = vld [vmem:[%s0 + $0x430] sm:$0xff]
  %v143 = vld [vmem:[%s0 + $0x438] sm:$0xff]
  %v144 = vld [vmem:[%s0 + $0x440] sm:$0xff]
  %v145 = vld [vmem:[%s0 + $0x448] sm:$0xff]
  %v146 = vld [vmem:[%s0 + $0x450] sm:$0xff]
  %v147 = vld [vmem:[%s0 + $0x458] sm:$0xff]
  %v148 = vld [vmem:[%s0 + $0x460] sm:$0xff]
  %v149 = vld [vmem:[%s0 + $0x468] sm:$0xff]
  %v150 = vld [vmem:[%s0 + $0x470] sm:$0xff]
  %v151 = vld [vmem:[%s0 + $0x478] sm:$0xff]
  %v152 = vld [vmem:[%s0 + $0x480] sm:$0xff]
  %v153 = vld [vmem:[%s0 + $0x488] sm:$0xff]
  %v154 = vld [vmem:[%s0 + $0x490] sm:$0xff]
  %v155 = vld [vmem:[%s0 + $0x498] sm:$0xff]
  %v156 = vld [vmem:[%s0 + $0x4a0] sm:$0xff]
  %v157 = vld [vmem:[%s0 + $0x4a8] sm:$0xff]
  %v158 = vld [vmem:[%s0 + $0x4b0] sm:$0xff]
  %v159 = vld [vmem:[%s0 + $0x4b8] sm:$0xff]
  %v160 = vld [vmem:[%s0 + $0x4c0] sm:$0xff]
  %v161 = vld [vmem:[%s0 + $0x4c8] sm:$0xff]
  %v162 = vld [vmem:[%s0 + $0x4d0] sm:$0xff]
  %v163 = vld [vmem:[%s0 + $0x4d8] sm:$0xff]
  %v164 = vld [vmem:[%s0 + $0x4e0] sm:$0xff]
  %v165 = vld [vmem:[%s0 + $0x4e8] sm:$0xff]
  %v166 = vld [vmem:[%s0 + $0x4f0] sm:$0xff]
  %v167 = vld [vmem:[%s0 + $0x4f8] sm:$0xff]
  %v168 = vld [vmem:[%s0 + $0x500] sm:$0xff]
  %v169 = vld [vmem:[%s0 + $0x508] sm:$0xff]
  %v170 = vld [vmem:[%s0 + $0x510] sm:$0xff]
  %v171 = vld [vmem:[%s0 + $0x518] sm:$0xff]
  %v172 = vld [vmem:[%s0 + $0x520] sm:$0xff]
  %v173 = vld [vmem:[%s0 + $0x528] sm:$0xff]
  %v174 = vld [vmem:[%s0 + $0x530] sm:$0xff]
  %v175 = vld [vmem:[%s0 + $0x538] sm:$0xff]
  %v176 = vld [vmem:[%s0 + $0x540] sm:$0xff]
  %v177 = vld [vmem:[%s0 + $0x548] sm:$0xff]
  %v178 = vld [vmem:[%s0 + $0x550] sm:$0xff]
  %v179 = vld [vmem:[%s0 + $0x558] sm:$0xff]
  %v180 = vld [vmem:[%s0 + $0x560] sm:$0xff]
  %v181 = vld [vmem:[%s0 + $0x568] sm:$0xff]
  %v182 = vld [vmem:[%s0 + $0x570] sm:$0xff]
  %v183 = vld [vmem:[%s0 + $0x578] sm:$0xff]
  %v184 = vld [vmem:[%s0 + $0x580] sm:$0xff]
  %v185 = vld [vmem:[%s0 + $0x588] sm:$0xff]
  %v186 = vld [vmem:[%s0 + $0x590] sm:$0xff]
  %v187 = vld [vmem:[%s0 + $0x598] sm:$0xff]
  %v188 = vld [vmem:[%s0 + $0x5a0] sm:$0xff]
  %v189 = vld [vmem:[%s0 + $0x5a8] sm:$0xff]
  %v190 = vld [vmem:[%s0 + $0x5b0] sm:$0xff]
  %v191 = vld [vmem:[%s0 + $0x5b8] sm:$0xff]
  %v192 = vld [vmem:[%s0 + $0x5c0] sm:$0xff]
  %v193 = vld [vmem:[%s0 + $0x5c8] sm:$0xff]
  %v194 = vld [vmem:[%s0 + $0x5d0] sm:$0xff]
  %v195 = vld [vmem:[%s0 + $0x5d8] sm:$0xff]
  %v196 = vld [vmem:[%s0 + $0x5e0] sm:$0xff]
  %v197 = vld [vmem:[%s0 + $0x5e8] sm:$0xff]
  %v198 = vld [vmem:[%s0 + $0x5f0] sm:$0xff]
  %v199 = vld [vmem:[%s0 + $0x5f8] sm:$0xff]
  %v200 = vld [vmem:[%s0 + $0x600] sm:$0xff]
  %v201 = vld [vmem:[%s0 + $0x608] sm:$0xff]
  %v202 = vld [vmem:[%s0 + $0x610] sm:$0xff]
  %v203 = vld [vmem:[%s0 + $0x618] sm:$0xff]
  %v204 = vmax.f32 %v8, %v57
  %v205 = vmax.f32 %v204, %v106
  %v206 = vmax.f32 %v205, %v155
  %v207 = vmax.f32 %v9, %v58
  %v208 = vmax.f32 %v207, %v107
  %v209 = vmax.f32 %v208, %v156
  %v210 = vmax.f32 %v10, %v59
  %v211 = vmax.f32 %v210, %v108
  %v212 = vmax.f32 %v211, %v157
  %v213 = vmax.f32 %v11, %v60
  %v214 = vmax.f32 %v213, %v109
  %v215 = vmax.f32 %v214, %v158
  %v216 = vmax.f32 %v12, %v61
  %v217 = vmax.f32 %v216, %v110
  %v218 = vmax.f32 %v217, %v159
  %v219 = vmax.f32 %v13, %v62
  %v220 = vmax.f32 %v219, %v111
  %v221 = vmax.f32 %v220, %v160
  %v222 = vmax.f32 %v14, %v63
  %v223 = vmax.f32 %v222, %v112
  %v224 = vmax.f32 %v223, %v161
  %v225 = vmax.f32 %v15, %v64
  %v226 = vmax.f32 %v225, %v113
  %v227 = vmax.f32 %v226, %v162
  %v228 = vmax.f32 %v16, %v65
  %v229 = vmax.f32 %v228, %v114
  %v230 = vmax.f32 %v229, %v163
  %v231 = vmax.f32 %v17, %v66
  %v232 = vmax.f32 %v231, %v115
  %v233 = vmax.f32 %v232, %v164
  %v234 = vmax.f32 %v18, %v67
  %v235 = vmax.f32 %v234, %v116
  %v236 = vmax.f32 %v235, %v165
  %v237 = vmax.f32 %v19, %v68
  %v238 = vmax.f32 %v237, %v117
  %v239 = vmax.f32 %v238, %v166
  %v240 = vmax.f32 %v20, %v69
  %v241 = vmax.f32 %v240, %v118
  %v242 = vmax.f32 %v241, %v167
  %v243 = vmax.f32 %v21, %v70
  %v244 = vmax.f32 %v243, %v119
  %v245 = vmax.f32 %v244, %v168
  %v246 = vmax.f32 %v22, %v71
  %v247 = vmax.f32 %v246, %v120
  %v248 = vmax.f32 %v247, %v169
  %v249 = vmax.f32 %v23, %v72
  %v250 = vmax.f32 %v249, %v121
  %v251 = vmax.f32 %v250, %v170
  %v252 = vmax.f32 %v24, %v73
  %v253 = vmax.f32 %v252, %v122
  %v254 = vmax.f32 %v253, %v171
  %v255 = vmax.f32 %v25, %v74
  %v256 = vmax.f32 %v255, %v123
  %v257 = vmax.f32 %v256, %v172
  %v258 = vmax.f32 %v26, %v75
  %v259 = vmax.f32 %v258, %v124
  %v260 = vmax.f32 %v259, %v173
  %v261 = vmax.f32 %v27, %v76
  %v262 = vmax.f32 %v261, %v125
  %v263 = vmax.f32 %v262, %v174
  %v264 = vmax.f32 %v28, %v77
  %v265 = vmax.f32 %v264, %v126
  %v266 = vmax.f32 %v265, %v175
  %v267 = vmax.f32 %v29, %v78
  %v268 = vmax.f32 %v267, %v127
  %v269 = vmax.f32 %v268, %v176
  %v270 = vmax.f32 %v30, %v79
  %v271 = vmax.f32 %v270, %v128
  %v272 = vmax.f32 %v271, %v177
  %v273 = vmax.f32 %v31, %v80
  %v274 = vmax.f32 %v273, %v129
  %v275 = vmax.f32 %v274, %v178
  %v276 = vmax.f32 %v32, %v81
  %v277 = vmax.f32 %v276, %v130
  %v278 = vmax.f32 %v277, %v179
  %v279 = vmax.f32 %v33, %v82
  %v280 = vmax.f32 %v279, %v131
  %v281 = vmax.f32 %v280, %v180
  %v282 = vmax.f32 %v34, %v83
  %v283 = vmax.f32 %v282, %v132
  %v284 = vmax.f32 %v283, %v181
  %v285 = vmax.f32 %v35, %v84
  %v286 = vmax.f32 %v285, %v133
  %v287 = vmax.f32 %v286, %v182
  %v288 = vmax.f32 %v36, %v85
  %v289 = vmax.f32 %v288, %v134
  %v290 = vmax.f32 %v289, %v183
  %v291 = vmax.f32 %v37, %v86
  %v292 = vmax.f32 %v291, %v135
  %v293 = vmax.f32 %v292, %v184
  %v294 = vmax.f32 %v38, %v87
  %v295 = vmax.f32 %v294, %v136
  %v296 = vmax.f32 %v295, %v185
  %v297 = vmax.f32 %v39, %v88
  %v298 = vmax.f32 %v297, %v137
  %v299 = vmax.f32 %v298, %v186
  %v300 = vmax.f32 %v40, %v89
  %v301 = vmax.f32 %v300, %v138
  %v302 = vmax.f32 %v301, %v187
  %v303 = vmax.f32 %v41, %v90
  %v304 = vmax.f32 %v303, %v139
  %v305 = vmax.f32 %v304, %v188
  %v306 = vmax.f32 %v42, %v91
  %v307 = vmax.f32 %v306, %v140
  %v308 = vmax.f32 %v307, %v189
  %v309 = vmax.f32 %v43, %v92
  %v310 = vmax.f32 %v309, %v141
  %v311 = vmax.f32 %v310, %v190
  %v312 = vmax.f32 %v44, %v93
  %v313 = vmax.f32 %v312, %v142
  %v314 = vmax.f32 %v313, %v191
  %v315 = vmax.f32 %v45, %v94
  %v316 = vmax.f32 %v315, %v143
  %v317 = vmax.f32 %v316, %v192
  %v318 = vmax.f32 %v46, %v95
  %v319 = vmax.f32 %v318, %v144
  %v320 = vmax.f32 %v319, %v193
  %v321 = vmax.f32 %v47, %v96
  %v322 = vmax.f32 %v321, %v145
  %v323 = vmax.f32 %v322, %v194
  %v324 = vmax.f32 %v48, %v97
  %v325 = vmax.f32 %v324, %v146
  %v326 = vmax.f32 %v325, %v195
  %v327 = vmax.f32 %v49, %v98
  %v328 = vmax.f32 %v327, %v147
  %v329 = vmax.f32 %v328, %v196
  %v330 = vmax.f32 %v50, %v99
  %v331 = vmax.f32 %v330, %v148
  %v332 = vmax.f32 %v331, %v197
  %v333 = vmax.f32 %v51, %v100
  %v334 = vmax.f32 %v333, %v149
  %v335 = vmax.f32 %v334, %v198
  %v336 = vmax.f32 %v52, %v101
  %v337 = vmax.f32 %v336, %v150
  %v338 = vmax.f32 %v337, %v199
  %v339 = vmax.f32 %v53, %v102
  %v340 = vmax.f32 %v339, %v151
  %v341 = vmax.f32 %v340, %v200
  %v342 = vmax.f32 %v54, %v103
  %v343 = vmax.f32 %v342, %v152
  %v344 = vmax.f32 %v343, %v201
  %v345 = vmax.f32 %v55, %v104
  %v346 = vmax.f32 %v345, %v153
  %v347 = vmax.f32 %v346, %v202
  %v348 = vmax.f32 %v56, %v105
  %v349 = vmax.f32 %v348, %v154
  %v350 = vmax.f32 %v349, %v203
  %351 = vst [vmem:[%s1] sm:$0xff] %v206
  %352 = vst [vmem:[%s1 + $0x8] sm:$0xff] %v209
  %353 = vst [vmem:[%s1 + $0x10] sm:$0xff] %v212
  %354 = vst [vmem:[%s1 + $0x18] sm:$0xff] %v215
  %355 = vst [vmem:[%s1 + $0x20] sm:$0xff] %v218
  %356 = vst [vmem:[%s1 + $0x28] sm:$0xff] %v221
  %357 = vst [vmem:[%s1 + $0x30] sm:$0xff] %v224
  %358 = vst [vmem:[%s1 + $0x38] sm:$0xff] %v227
  %359 = vst [vmem:[%s1 + $0x40] sm:$0xff] %v230
  %360 = vst [vmem:[%s1 + $0x48] sm:$0xff] %v233
  %361 = vst [vmem:[%s1 + $0x50] sm:$0xff] %v236
  %362 = vst [vmem:[%s1 + $0x58] sm:$0xff] %v239
  %363 = vst [vmem:[%s1 + $0x60] sm:$0xff] %v242
  %364 = vst [vmem:[%s1 + $0x68] sm:$0xff] %v245
  %365 = vst [vmem:[%s1 + $0x70] sm:$0xff] %v248
  %366 = vst [vmem:[%s1 + $0x78] sm:$0xff] %v251
  %367 = vst [vmem:[%s1 + $0x80] sm:$0xff] %v254
  %368 = vst [vmem:[%s1 + $0x88] sm:$0xff] %v257
  %369 = vst [vmem:[%s1 + $0x90] sm:$0xff] %v260
  %370 = vst [vmem:[%s1 + $0x98] sm:$0xff] %v263
  %371 = vst [vmem:[%s1 + $0xa0] sm:$0xff] %v266
  %372 = vst [vmem:[%s1 + $0xa8] sm:$0xff] %v269
  %373 = vst [vmem:[%s1 + $0xb0] sm:$0xff] %v272
  %374 = vst [vmem:[%s1 + $0xb8] sm:$0xff] %v275
  %375 = vst [vmem:[%s1 + $0xc0] sm:$0xff] %v278
  %376 = vst [vmem:[%s1 + $0xc8] sm:$0xff] %v281
  %377 = vst [vmem:[%s1 + $0xd0] sm:$0xff] %v284
  %378 = vst [vmem:[%s1 + $0xd8] sm:$0xff] %v287
  %379 = vst [vmem:[%s1 + $0xe0] sm:$0xff] %v290
  %380 = vst [vmem:[%s1 + $0xe8] sm:$0xff] %v293
  %381 = vst [vmem:[%s1 + $0xf0] sm:$0xff] %v296
  %382 = vst [vmem:[%s1 + $0xf8] sm:$0xff] %v299
  %383 = vst [vmem:[%s1 + $0x100] sm:$0xff] %v302
  %384 = vst [vmem:[%s1 + $0x108] sm:$0xff] %v305
  %385 = vst [vmem:[%s1 + $0x110] sm:$0xff] %v308
  %386 = vst [vmem:[%s1 + $0x118] sm:$0xff] %v311
  %387 = vst [vmem:[%s1 + $0x120] sm:$0xff] %v314
  %388 = vst [vmem:[%s1 + $0x128] sm:$0xff] %v317
  %389 = vst [vmem:[%s1 + $0x130] sm:$0xff] %v320
  %390 = vst [vmem:[%s1 + $0x138] sm:$0xff] %v323
  %391 = vst [vmem:[%s1 + $0x140] sm:$0xff] %v326
  %392 = vst [vmem:[%s1 + $0x148] sm:$0xff] %v329
  %393 = vst [vmem:[%s1 + $0x150] sm:$0xff] %v332
  %394 = vst [vmem:[%s1 + $0x158] sm:$0xff] %v335
  %395 = vst [vmem:[%s1 + $0x160] sm:$0xff] %v338
  %396 = vst [vmem:[%s1 + $0x168] sm:$0xff] %v341
  %397 = vst [vmem:[%s1 + $0x170] sm:$0xff] %v344
  %398 = vst [vmem:[%s1 + $0x178] sm:$0xff] %v347
  %399 = vst [vmem:[%s1 + $0x180] sm:$0xff] %v350
  // Predicated region
  $region6: #{lenet_forward.6} parent=0 // pred_check
    _
  $region7: #{lenet_forward.6} parent=0 // pred_check_branch
    %401 = sbr.rel (0) target = $region9
  $region8: #{lenet_forward.6} parent=0 // pred_region
    _
  $region9: #{lenet_forward.6} parent=0 // pred_fallthru
    _
  // Predicated region
  $region10: #{lenet_forward.6} parent=0 // pred_check
    _
  $region11: #{lenet_forward.6} parent=0 // pred_check_branch
    %403 = sbr.rel (0) target = $region13
  $region12: #{lenet_forward.6} parent=0 // pred_region
    _
  $region13: #{lenet_forward.6} parent=0 // pred_fallthru
    _

// kernel: lenet_forward.7
$region0: #{lenet_forward.7}
  #allocation0 [shape = 'u32[]', space=smem, size = 0x4, offset = 0x4, fixed_abs, tag = 'smem constant byte address 0x4 - core index']
  #allocation1 [shape = 'u32[144,128]{1,0:T(1,128)}', space=vmem, size = 0x12000, scoped, tag = 'internal scratch']
  %s0 = inlined_call_operand.vmem [shape: bf16[200,256], index: 0, kind: input, shape index: {}]
  %s1 = inlined_call_operand.vmem [shape: bf16[256,128], index: 1, kind: input, shape index: {}]
  %s2 = inlined_call_operand.vmem [shape: f32[1,128], index: 2, kind: input, shape index: {}]
  %s3 = inlined_call_operand.vmem [shape: f32[200,128], index: 3, kind: output, shape index: {}]
  %s4 = sld [smem:[#allocation0]]
  $region22: #{lenet_forward.7} parent=0
    _
  %s6 = ssub.s32 1, %s4
  %s7 = scalar_select 0, %s6, %s4
  // Predicated region
  $region2: #{lenet_forward.7} parent=0 // pred_check
    _
  $region3: #{lenet_forward.7} parent=0 // pred_check_branch
    %9 = sbr.rel (0) target = $region5
  $region4: #{lenet_forward.7} parent=0 // pred_region
    _
  $region5: #{lenet_forward.7} parent=0 // pred_fallthru
    _
  // Predicated region
  $region6: #{lenet_forward.7} parent=0 // pred_check
    _
  $region7: #{lenet_forward.7} parent=0 // pred_check_branch
    %11 = sbr.rel (0) target = $region9
  $region8: #{lenet_forward.7} parent=0 // pred_region
    _
  $region9: #{lenet_forward.7} parent=0 // pred_fallthru
    _
  // Predicated region
  $region10: #{lenet_forward.7} parent=0 // pred_check
    _
  $region11: #{lenet_forward.7} parent=0 // pred_check_branch
    %13 = sbr.rel (0) target = $region13
  $region12: #{lenet_forward.7} parent=0 // pred_region
    _
  $region13: #{lenet_forward.7} parent=0 // pred_fallthru
    _
  %v15 = vld [vmem:[%s0] sm:$0xff]
  %v16 = vld [vmem:[%s0 + $0x8] sm:$0xff]
  %v17 = vld [vmem:[%s0 + $0x10] sm:$0xff]
  %v18 = vld [vmem:[%s0 + $0x18] sm:$0xff]
  %v19 = vld [vmem:[%s0 + $0x20] sm:$0xff]
  %v20 = vld [vmem:[%s0 + $0x28] sm:$0xff]
  %v21 = vld [vmem:[%s0 + $0x30] sm:$0xff]
  %v22 = vld [vmem:[%s0 + $0x38] sm:$0xff]
  %v23 = vld [vmem:[%s0 + $0x40] sm:$0xff]
  %v24 = vld [vmem:[%s0 + $0x48] sm:$0xff]
  %v25 = vld [vmem:[%s0 + $0x50] sm:$0xff]
  %v26 = vld [vmem:[%s0 + $0x58] sm:$0xff]
  %v27 = vld [vmem:[%s0 + $0x60] sm:$0xff]
  %v28 = vld [vmem:[%s0 + $0x68] sm:$0xff]
  %v29 = vld [vmem:[%s0 + $0x70] sm:$0xff]
  %v30 = vld [vmem:[%s0 + $0x78] sm:$0xff]
  %v31 = vld [vmem:[%s0 + $0x80] sm:$0xff]
  %v32 = vld [vmem:[%s0 + $0x88] sm:$0xff]
  %v33 = vld [vmem:[%s0 + $0x90] sm:$0xff]
  %v34 = vld [vmem:[%s0 + $0x98] sm:$0xff]
  %v35 = vld [vmem:[%s0 + $0xa0] sm:$0xff]
  %v36 = vld [vmem:[%s0 + $0xa8] sm:$0xff]
  %v37 = vld [vmem:[%s0 + $0xb0] sm:$0xff]
  %v38 = vld [vmem:[%s0 + $0xb8] sm:$0xff]
  %v39 = vld [vmem:[%s0 + $0xc0] sm:$0xff]
  %v40 = vld [vmem:[%s1] sm:$0xf]
  %v41 = vld [vmem:[%s1 + $0x4] sm:$0xf]
  %v42 = vld [vmem:[%s1 + $0x8] sm:$0xf]
  %v43 = vld [vmem:[%s1 + $0xc] sm:$0xf]
  %v44 = vld [vmem:[%s1 + $0x10] sm:$0xf]
  %v45 = vld [vmem:[%s1 + $0x14] sm:$0xf]
  %v46 = vld [vmem:[%s1 + $0x18] sm:$0xf]
  %v47 = vld [vmem:[%s1 + $0x1c] sm:$0xf]
  %v48 = vld [vmem:[%s1 + $0x20] sm:$0xf]
  %v49 = vld [vmem:[%s1 + $0x24] sm:$0xf]
  %v50 = vld [vmem:[%s1 + $0x28] sm:$0xf]
  %v51 = vld [vmem:[%s1 + $0x2c] sm:$0xf]
  %v52 = vld [vmem:[%s1 + $0x30] sm:$0xf]
  %v53 = vld [vmem:[%s1 + $0x34] sm:$0xf]
  %v54 = vld [vmem:[%s1 + $0x38] sm:$0xf]
  %v55 = vld [vmem:[%s1 + $0x3c] sm:$0xf]
  %v56 = vld [vmem:[%s1 + $0x40] sm:$0xf]
  %v57 = vld [vmem:[%s1 + $0x44] sm:$0xf]
  %v58 = vld [vmem:[%s1 + $0x48] sm:$0xf]
  %v59 = vld [vmem:[%s1 + $0x4c] sm:$0xf]
  %v60 = vld [vmem:[%s1 + $0x50] sm:$0xf]
  %v61 = vld [vmem:[%s1 + $0x54] sm:$0xf]
  %v62 = vld [vmem:[%s1 + $0x58] sm:$0xf]
  %v63 = vld [vmem:[%s1 + $0x5c] sm:$0xf]
  %v64 = vld [vmem:[%s1 + $0x60] sm:$0xf]
  %v65 = vld [vmem:[%s1 + $0x64] sm:$0xf]
  %v66 = vld [vmem:[%s1 + $0x68] sm:$0xf]
  %v67 = vld [vmem:[%s1 + $0x6c] sm:$0xf]
  %v68 = vld [vmem:[%s1 + $0x70] sm:$0xf]
  %v69 = vld [vmem:[%s1 + $0x74] sm:$0xf]
  %v70 = vld [vmem:[%s1 + $0x78] sm:$0xf]
  %v71 = vld [vmem:[%s1 + $0x7c] sm:$0xf]
  %v72 = vld [vmem:[%s2] sm:$0x1]
  %v74 = vlaneseq
  %v75 = vshrl.u32 %v74, 7
  %v76 = vsub.s32 0, %v75
  %v77 = vrot.slane %v72, %v76
  %v104 = vunpack.c.l.b16 %v15
  %v105 = vunpack.c.h.b16 %v15
  %v106 = vunpack.c.l.b16 %v16
  %v107 = vunpack.c.h.b16 %v16
  %v108 = vunpack.c.l.b16 %v17
  %v109 = vunpack.c.h.b16 %v17
  %v110 = vunpack.c.l.b16 %v18
  %v111 = vunpack.c.h.b16 %v18
  %v112 = vunpack.c.l.b16 %v19
  %v113 = vunpack.c.h.b16 %v19
  %v114 = vunpack.c.l.b16 %v20
  %v115 = vunpack.c.h.b16 %v20
  %v116 = vunpack.c.l.b16 %v21
  %v117 = vunpack.c.h.b16 %v21
  %v118 = vunpack.c.l.b16 %v22
  %v119 = vunpack.c.h.b16 %v22
  %v120 = vunpack.c.l.b16 %v23
  %v121 = vunpack.c.h.b16 %v23
  %v122 = vunpack.c.l.b16 %v24
  %v123 = vunpack.c.h.b16 %v24
  %v124 = vunpack.c.l.b16 %v25
  %v125 = vunpack.c.h.b16 %v25
  %v126 = vunpack.c.l.b16 %v26
  %v127 = vunpack.c.h.b16 %v26
  %v128 = vunpack.c.l.b16 %v27
  %v129 = vunpack.c.h.b16 %v27
  %v130 = vunpack.c.l.b16 %v28
  %v131 = vunpack.c.h.b16 %v28
  %v132 = vunpack.c.l.b16 %v29
  %v133 = vunpack.c.h.b16 %v29
  %v134 = vunpack.c.l.b16 %v30
  %v135 = vunpack.c.h.b16 %v30
  %v136 = vunpack.c.l.b16 %v31
  %v137 = vunpack.c.h.b16 %v31
  %v138 = vunpack.c.l.b16 %v32
  %v139 = vunpack.c.h.b16 %v32
  %v140 = vunpack.c.l.b16 %v33
  %v141 = vunpack.c.h.b16 %v33
  %v142 = vunpack.c.l.b16 %v34
  %v143 = vunpack.c.h.b16 %v34
  %v144 = vunpack.c.l.b16 %v35
  %v145 = vunpack.c.h.b16 %v35
  %v146 = vunpack.c.l.b16 %v36
  %v147 = vunpack.c.h.b16 %v36
  %v148 = vunpack.c.l.b16 %v37
  %v149 = vunpack.c.h.b16 %v37
  %v150 = vunpack.c.l.b16 %v38
  %v151 = vunpack.c.h.b16 %v38
  %v152 = vunpack.c.l.b16 %v39
  %v153 = vunpack.c.h.b16 %v39
  %v154 = vpack.c.b16 %v106, %v104
  %v155 = vpack.c.b16 %v107, %v105
  %v156 = vpack.c.b16 %v110, %v108
  %v157 = vpack.c.b16 %v111, %v109
  %v158 = vpack.c.b16 %v114, %v112
  %v159 = vpack.c.b16 %v115, %v113
  %v160 = vpack.c.b16 %v118, %v116
  %v161 = vpack.c.b16 %v119, %v117
  %v162 = vpack.c.b16 %v122, %v120
  %v163 = vpack.c.b16 %v123, %v121
  %v164 = vpack.c.b16 %v126, %v124
  %v165 = vpack.c.b16 %v127, %v125
  %v166 = vpack.c.b16 %v130, %v128
  %v167 = vpack.c.b16 %v131, %v129
  %v168 = vpack.c.b16 %v134, %v132
  %v169 = vpack.c.b16 %v135, %v133
  %v170 = vpack.c.b16 %v138, %v136
  %v171 = vpack.c.b16 %v139, %v137
  %v172 = vpack.c.b16 %v142, %v140
  %v173 = vpack.c.b16 %v143, %v141
  %v174 = vpack.c.b16 %v146, %v144
  %v175 = vpack.c.b16 %v147, %v145
  %v176 = vpack.c.b16 %v150, %v148
  %v177 = vpack.c.b16 %v151, %v149
  %v178 = vpack.c.b16 %v152, %v152
  %v179 = vpack.c.b16 %v153, %v153
  %v238 = vunpack.c.l.b16 %v40
  %v239 = vunpack.c.l.b16 %v41
  %v240 = vunpack.c.l.b16 %v42
  %v241 = vunpack.c.l.b16 %v43
  %v242 = vunpack.c.l.b16 %v44
  %v243 = vunpack.c.l.b16 %v45
  %v244 = vunpack.c.l.b16 %v46
  %v245 = vunpack.c.l.b16 %v47
  %v246 = vunpack.c.l.b16 %v48
  %v247 = vunpack.c.l.b16 %v49
  %v248 = vunpack.c.l.b16 %v50
  %v249 = vunpack.c.l.b16 %v51
  %v250 = vunpack.c.l.b16 %v52
  %v251 = vunpack.c.l.b16 %v53
  %v252 = vunpack.c.l.b16 %v54
  %v253 = vunpack.c.l.b16 %v55
  %v254 = vunpack.c.l.b16 %v56
  %v255 = vunpack.c.l.b16 %v57
  %v256 = vunpack.c.l.b16 %v58
  %v257 = vunpack.c.l.b16 %v59
  %v258 = vunpack.c.l.b16 %v60
  %v259 = vunpack.c.l.b16 %v61
  %v260 = vunpack.c.l.b16 %v62
  %v261 = vunpack.c.l.b16 %v63
  %v262 = vunpack.c.l.b16 %v64
  %v263 = vunpack.c.l.b16 %v65
  %v264 = vunpack.c.l.b16 %v66
  %v265 = vunpack.c.l.b16 %v67
  %v266 = vunpack.c.l.b16 %v68
  %v267 = vunpack.c.l.b16 %v69
  %v268 = vunpack.c.l.b16 %v70
  %v269 = vunpack.c.l.b16 %v71
  %v270 = vpack.c.b16 %v239, %v238
  %v271 = vpack.c.b16 %v241, %v240
  %v272 = vpack.c.b16 %v243, %v242
  %v273 = vpack.c.b16 %v245, %v244
  %v274 = vpack.c.b16 %v247, %v246
  %v275 = vpack.c.b16 %v249, %v248
  %v276 = vpack.c.b16 %v251, %v250
  %v277 = vpack.c.b16 %v253, %v252
  %v278 = vpack.c.b16 %v255, %v254
  %v279 = vpack.c.b16 %v257, %v256
  %v280 = vpack.c.b16 %v259, %v258
  %v281 = vpack.c.b16 %v261, %v260
  %v282 = vpack.c.b16 %v263, %v262
  %v283 = vpack.c.b16 %v265, %v264
  %v284 = vpack.c.b16 %v267, %v266
  %v285 = vpack.c.b16 %v269, %v268
  %302 = vmatprep.subr.bf16.mxu0 0
  %303 = vmatpush1.bf16.msra.mxu0 %v270
  %304 = vmatprep.subr.bf16.mxu0 0
  %305 = vmatpush1.bf16.msra.mxu0 %v271
  %306 = vmatprep.subr.bf16.mxu0 0
  %307 = vmatpush1.bf16.msra.mxu0 %v272
  %308 = vmatprep.subr.bf16.mxu0 0
  %309 = vmatpush1.bf16.msra.mxu0 %v273
  %310 = vmatprep.subr.bf16.mxu0 0
  %311 = vmatpush1.bf16.msra.mxu0 %v274
  %312 = vmatprep.subr.bf16.mxu0 0
  %313 = vmatpush1.bf16.msra.mxu0 %v275
  %314 = vmatprep.subr.bf16.mxu0 0
  %315 = vmatpush1.bf16.msra.mxu0 %v276
  %316 = vmatprep.subr.bf16.mxu0 0
  %317 = vmatpush1.bf16.msra.mxu0 %v277
  %318 = vmatprep.subr.bf16.mxu0 0
  %319 = vmatpush1.bf16.msra.mxu0 %v278
  %320 = vmatprep.subr.bf16.mxu0 0
  %321 = vmatpush1.bf16.msra.mxu0 %v279
  %322 = vmatprep.subr.bf16.mxu0 0
  %323 = vmatpush1.bf16.msra.mxu0 %v280
  %324 = vmatprep.subr.bf16.mxu0 0
  %325 = vmatpush1.bf16.msra.mxu0 %v281
  %326 = vmatprep.subr.bf16.mxu0 0
  %327 = vmatpush1.bf16.msra.mxu0 %v282
  %328 = vmatprep.subr.bf16.mxu0 0
  %329 = vmatpush1.bf16.msra.mxu0 %v283
  %330 = vmatprep.subr.bf16.mxu0 0
  %331 = vmatpush1.bf16.msra.mxu0 %v284
  %332 = vmatprep.subr.bf16.mxu0 0
  %333 = vmatpush1.bf16.msra.mxu0 %v285
  %334 = vmatprep.mubr.bf16.mxu0 %v155
  %335 = vmatmul.mubr.bf16.gmra.mrb[0].mxu0 %v154
  %v336 = vpop.f32.mrb[0].mxu0
  %v337 = vadd.f32 %v77, %v336
  %v338 = vpop.f32.mrb[0].mxu0
  %v339 = vpop.f32.mrb[0].mxu0
  %v340 = vadd.f32 %v77, %v339
  %v341 = vpop.f32.mrb[0].mxu0
  %342 = vmatprep.mubr.bf16.mxu0 %v157
  %343 = vmatmul.mubr.bf16.gmra.mrb[0].mxu0 %v156
  %v344 = vpop.f32.mrb[0].mxu0
  %v345 = vadd.f32 %v77, %v344
  %v346 = vpop.f32.mrb[0].mxu0
  %v347 = vpop.f32.mrb[0].mxu0
  %v348 = vadd.f32 %v77, %v347
  %v349 = vpop.f32.mrb[0].mxu0
  %350 = vmatprep.mubr.bf16.mxu0 %v159
  %351 = vmatmul.mubr.bf16.gmra.mrb[0].mxu0 %v158
  %v352 = vpop.f32.mrb[0].mxu0
  %v353 = vadd.f32 %v77, %v352
  %v354 = vpop.f32.mrb[0].mxu0
  %v355 = vpop.f32.mrb[0].mxu0
  %v356 = vadd.f32 %v77, %v355
  %v357 = vpop.f32.mrb[0].mxu0
  %358 = vmatprep.mubr.bf16.mxu0 %v161
  %359 = vmatmul.mubr.bf16.gmra.mrb[0].mxu0 %v160
  %v360 = vpop.f32.mrb[0].mxu0
  %v361 = vadd.f32 %v77, %v360
  %v362 = vpop.f32.mrb[0].mxu0
  %v363 = vpop.f32.mrb[0].mxu0
  %v364 = vadd.f32 %v77, %v363
  %v365 = vpop.f32.mrb[0].mxu0
  %366 = vmatprep.mubr.bf16.mxu0 %v163
  %367 = vmatmul.mubr.bf16.gmra.mrb[0].mxu0 %v162
  %v368 = vpop.f32.mrb[0].mxu0
  %v369 = vadd.f32 %v77, %v368
  %v370 = vpop.f32.mrb[0].mxu0
  %v371 = vpop.f32.mrb[0].mxu0
  %v372 = vadd.f32 %v77, %v371
  %v373 = vpop.f32.mrb[0].mxu0
  %374 = vmatprep.mubr.bf16.mxu0 %v165
  %375 = vmatmul.mubr.bf16.gmra.mrb[0].mxu0 %v164
  %v376 = vpop.f32.mrb[0].mxu0
  %v377 = vadd.f32 %v77, %v376
  %v378 = vpop.f32.mrb[0].mxu0
  %v379 = vpop.f32.mrb[0].mxu0
  %v380 = vadd.f32 %v77, %v379
  %v381 = vpop.f32.mrb[0].mxu0
  %382 = vmatprep.mubr.bf16.mxu0 %v167
  %383 = vmatmul.mubr.bf16.gmra.mrb[0].mxu0 %v166
  %v384 = vpop.f32.mrb[0].mxu0
  %v385 = vadd.f32 %v77, %v384
  %v386 = vpop.f32.mrb[0].mxu0
  %v387 = vpop.f32.mrb[0].mxu0
  %v388 = vadd.f32 %v77, %v387
  %v389 = vpop.f32.mrb[0].mxu0
  %390 = vmatprep.mubr.bf16.mxu0 %v169
  %391 = vmatmul.mubr.bf16.gmra.mrb[0].mxu0 %v168
  %v392 = vpop.f32.mrb[0].mxu0
  %v393 = vadd.f32 %v77, %v392
  %v394 = vpop.f32.mrb[0].mxu0
  %v395 = vpop.f32.mrb[0].mxu0
  %v396 = vadd.f32 %v77, %v395
  %v397 = vpop.f32.mrb[0].mxu0
  %398 = vmatprep.mubr.bf16.mxu0 %v171
  %399 = vmatmul.mubr.bf16.gmra.mrb[0].mxu0 %v170
  %v400 = vpop.f32.mrb[0].mxu0
  %v401 = vadd.f32 %v77, %v400
  %v402 = vpop.f32.mrb[0].mxu0
  %v403 = vpop.f32.mrb[0].mxu0
  %v404 = vadd.f32 %v77, %v403
  %v405 = vpop.f32.mrb[0].mxu0
  %406 = vmatprep.mubr.bf16.mxu0 %v173
  %407 = vmatmul.mubr.bf16.gmra.mrb[0].mxu0 %v172
  %v408 = vpop.f32.mrb[0].mxu0
  %v409 = vadd.f32 %v77, %v408
  %v410 = vpop.f32.mrb[0].mxu0
  %v411 = vpop.f32.mrb[0].mxu0
  %v412 = vadd.f32 %v77, %v411
  %v413 = vpop.f32.mrb[0].mxu0
  %414 = vmatprep.mubr.bf16.mxu0 %v175
  %415 = vmatmul.mubr.bf16.gmra.mrb[0].mxu0 %v174
  %v416 = vpop.f32.mrb[0].mxu0
  %v417 = vadd.f32 %v77, %v416
  %v418 = vpop.f32.mrb[0].mxu0
  %v419 = vpop.f32.mrb[0].mxu0
  %v420 = vadd.f32 %v77, %v419
  %v421 = vpop.f32.mrb[0].mxu0
  %422 = vmatprep.mubr.bf16.mxu0 %v177
  %423 = vmatmul.mubr.bf16.gmra.mrb[0].mxu0 %v176
  %v424 = vpop.f32.mrb[0].mxu0
  %v425 = vadd.f32 %v77, %v424
  %v426 = vpop.f32.mrb[0].mxu0
  %v427 = vpop.f32.mrb[0].mxu0
  %v428 = vadd.f32 %v77, %v427
  %v429 = vpop.f32.mrb[0].mxu0
  %430 = vmatprep.mubr.bf16.mxu0 %v179
  %431 = vmatmul.mubr.bf16.gmra.mrb[0].mxu0 %v178
  %v432 = vpop.f32.mrb[0].mxu0
  %v433 = vadd.f32 %v77, %v432
  %v434 = vpop.f32.mrb[0].mxu0
  %v435 = vpop.f32.mrb[0].mxu0
  %v436 = vpop.f32.mrb[0].mxu0
  %437 = vdwg.mxu0
  %v438 = vmax.f32 %v337, 0.0
  %v439 = vmax.f32 %v340, 0.0
  %v440 = vmax.f32 %v345, 0.0
  %v441 = vmax.f32 %v348, 0.0
  %v442 = vmax.f32 %v353, 0.0
  %v443 = vmax.f32 %v356, 0.0
  %v444 = vmax.f32 %v361, 0.0
  %v445 = vmax.f32 %v364, 0.0
  %v446 = vmax.f32 %v369, 0.0
  %v447 = vmax.f32 %v372, 0.0
  %v448 = vmax.f32 %v377, 0.0
  %v449 = vmax.f32 %v380, 0.0
  %v450 = vmax.f32 %v385, 0.0
  %v451 = vmax.f32 %v388, 0.0
  %v452 = vmax.f32 %v393, 0.0
  %v453 = vmax.f32 %v396, 0.0
  %v454 = vmax.f32 %v401, 0.0
  %v455 = vmax.f32 %v404, 0.0
  %v456 = vmax.f32 %v409, 0.0
  %v457 = vmax.f32 %v412, 0.0
  %v458 = vmax.f32 %v417, 0.0
  %v459 = vmax.f32 %v420, 0.0
  %v460 = vmax.f32 %v425, 0.0
  %v461 = vmax.f32 %v428, 0.0
  %v462 = vmax.f32 %v433, 0.0
  %463 = vst [vmem:[%s3] sm:$0xff] %v438
  %464 = vst [vmem:[%s3 + $0x8] sm:$0xff] %v439
  %465 = vst [vmem:[%s3 + $0x10] sm:$0xff] %v440
  %466 = vst [vmem:[%s3 + $0x18] sm:$0xff] %v441
  %467 = vst [vmem:[%s3 + $0x20] sm:$0xff] %v442
  %468 = vst [vmem:[%s3 + $0x28] sm:$0xff] %v443
  %469 = vst [vmem:[%s3 + $0x30] sm:$0xff] %v444
  %470 = vst [vmem:[%s3 + $0x38] sm:$0xff] %v445
  %471 = vst [vmem:[%s3 + $0x40] sm:$0xff] %v446
  %472 = vst [vmem:[%s3 + $0x48] sm:$0xff] %v447
  %473 = vst [vmem:[%s3 + $0x50] sm:$0xff] %v448
  %474 = vst [vmem:[%s3 + $0x58] sm:$0xff] %v449
  %475 = vst [vmem:[%s3 + $0x60] sm:$0xff] %v450
  %476 = vst [vmem:[%s3 + $0x68] sm:$0xff] %v451
  %477 = vst [vmem:[%s3 + $0x70] sm:$0xff] %v452
  %478 = vst [vmem:[%s3 + $0x78] sm:$0xff] %v453
  %479 = vst [vmem:[%s3 + $0x80] sm:$0xff] %v454
  %480 = vst [vmem:[%s3 + $0x88] sm:$0xff] %v455
  %481 = vst [vmem:[%s3 + $0x90] sm:$0xff] %v456
  %482 = vst [vmem:[%s3 + $0x98] sm:$0xff] %v457
  %483 = vst [vmem:[%s3 + $0xa0] sm:$0xff] %v458
  %484 = vst [vmem:[%s3 + $0xa8] sm:$0xff] %v459
  %485 = vst [vmem:[%s3 + $0xb0] sm:$0xff] %v460
  %486 = vst [vmem:[%s3 + $0xb8] sm:$0xff] %v461
  %487 = vst [vmem:[%s3 + $0xc0] sm:$0xff] %v462
  // Predicated region
  $region14: #{lenet_forward.7} parent=0 // pred_check
    _
  $region15: #{lenet_forward.7} parent=0 // pred_check_branch
    %489 = sbr.rel (0) target = $region17
  $region16: #{lenet_forward.7} parent=0 // pred_region
    _
  $region17: #{lenet_forward.7} parent=0 // pred_fallthru
    _
  // Predicated region
  $region18: #{lenet_forward.7} parent=0 // pred_check
    _
  $region19: #{lenet_forward.7} parent=0 // pred_check_branch
    %491 = sbr.rel (0) target = $region21
  $region20: #{lenet_forward.7} parent=0 // pred_region
    _
  $region21: #{lenet_forward.7} parent=0 // pred_fallthru
    _

// kernel: lenet_forward.8
$region0: #{lenet_forward.8}
  #allocation0 [shape = 'u32[]', space=smem, size = 0x4, offset = 0x4, fixed_abs, tag = 'smem constant byte address 0x4 - core index']
  #allocation1 [shape = 'u32[144,128]{1,0:T(1,128)}', space=vmem, size = 0x12000, scoped, tag = 'internal scratch']
  %s0 = inlined_call_operand.vmem [shape: f32[4,56,128], index: 0, kind: input, shape index: {}]
  %s1 = inlined_call_operand.vmem [shape: f32[56,128], index: 1, kind: output, shape index: {}]
  %s2 = sld [smem:[#allocation0]]
  $region14: #{lenet_forward.8} parent=0
    _
  %s4 = ssub.s32 1, %s2
  %s5 = scalar_select 0, %s4, %s2
  // Predicated region
  $region2: #{lenet_forward.8} parent=0 // pred_check
    _
  $region3: #{lenet_forward.8} parent=0 // pred_check_branch
    %7 = sbr.rel (0) target = $region5
  $region4: #{lenet_forward.8} parent=0 // pred_region
    _
  $region5: #{lenet_forward.8} parent=0 // pred_fallthru
    _
  %v8 = vld [vmem:[%s0] sm:$0xff]
  %v9 = vld [vmem:[%s0 + $0x8] sm:$0xff]
  %v10 = vld [vmem:[%s0 + $0x10] sm:$0xff]
  %v11 = vld [vmem:[%s0 + $0x18] sm:$0xff]
  %v12 = vld [vmem:[%s0 + $0x20] sm:$0xff]
  %v13 = vld [vmem:[%s0 + $0x28] sm:$0xff]
  %v14 = vld [vmem:[%s0 + $0x30] sm:$0xff]
  %v15 = vld [vmem:[%s0 + $0x38] sm:$0xff]
  %v16 = vld [vmem:[%s0 + $0x40] sm:$0xff]
  %v17 = vld [vmem:[%s0 + $0x48] sm:$0xff]
  %v18 = vld [vmem:[%s0 + $0x50] sm:$0xff]
  %v19 = vld [vmem:[%s0 + $0x58] sm:$0xff]
  %v20 = vld [vmem:[%s0 + $0x60] sm:$0xff]
  %v21 = vld [vmem:[%s0 + $0x68] sm:$0xff]
  %v22 = vld [vmem:[%s0 + $0x70] sm:$0xff]
  %v23 = vld [vmem:[%s0 + $0x78] sm:$0xff]
  %v24 = vld [vmem:[%s0 + $0x80] sm:$0xff]
  %v25 = vld [vmem:[%s0 + $0x88] sm:$0xff]
  %v26 = vld [vmem:[%s0 + $0x90] sm:$0xff]
  %v27 = vld [vmem:[%s0 + $0x98] sm:$0xff]
  %v28 = vld [vmem:[%s0 + $0xa0] sm:$0xff]
  %v29 = vld [vmem:[%s0 + $0xa8] sm:$0xff]
  %v30 = vld [vmem:[%s0 + $0xb0] sm:$0xff]
  %v31 = vld [vmem:[%s0 + $0xb8] sm:$0xff]
  %v32 = vld [vmem:[%s0 + $0xc0] sm:$0xff]
  %v33 = vld [vmem:[%s0 + $0xc8] sm:$0xff]
  %v34 = vld [vmem:[%s0 + $0xd0] sm:$0xff]
  %v35 = vld [vmem:[%s0 + $0xd8] sm:$0xff]
  %v36 = vmax.f32 %v8, %v15
  %v37 = vmax.f32 %v36, %v22
  %v38 = vmax.f32 %v37, %v29
  %v39 = vmax.f32 %v9, %v16
  %v40 = vmax.f32 %v39, %v23
  %v41 = vmax.f32 %v40, %v30
  %v42 = vmax.f32 %v10, %v17
  %v43 = vmax.f32 %v42, %v24
  %v44 = vmax.f32 %v43, %v31
  %v45 = vmax.f32 %v11, %v18
  %v46 = vmax.f32 %v45, %v25
  %v47 = vmax.f32 %v46, %v32
  %v48 = vmax.f32 %v12, %v19
  %v49 = vmax.f32 %v48, %v26
  %v50 = vmax.f32 %v49, %v33
  %v51 = vmax.f32 %v13, %v20
  %v52 = vmax.f32 %v51, %v27
  %v53 = vmax.f32 %v52, %v34
  %v54 = vmax.f32 %v14, %v21
  %v55 = vmax.f32 %v54, %v28
  %v56 = vmax.f32 %v55, %v35
  %57 = vst [vmem:[%s1] sm:$0xff] %v38
  %58 = vst [vmem:[%s1 + $0x8] sm:$0xff] %v41
  %59 = vst [vmem:[%s1 + $0x10] sm:$0xff] %v44
  %60 = vst [vmem:[%s1 + $0x18] sm:$0xff] %v47
  %61 = vst [vmem:[%s1 + $0x20] sm:$0xff] %v50
  %62 = vst [vmem:[%s1 + $0x28] sm:$0xff] %v53
  %63 = vst [vmem:[%s1 + $0x30] sm:$0xff] %v56
  // Predicated region
  $region6: #{lenet_forward.8} parent=0 // pred_check
    _
  $region7: #{lenet_forward.8} parent=0 // pred_check_branch
    %65 = sbr.rel (0) target = $region9
  $region8: #{lenet_forward.8} parent=0 // pred_region
    _
  $region9: #{lenet_forward.8} parent=0 // pred_fallthru
    _
  // Predicated region
  $region10: #{lenet_forward.8} parent=0 // pred_check
    _
  $region11: #{lenet_forward.8} parent=0 // pred_check_branch
    %67 = sbr.rel (0) target = $region13
  $region12: #{lenet_forward.8} parent=0 // pred_region
    _
  $region13: #{lenet_forward.8} parent=0 // pred_fallthru
    _

// kernel: lenet_forward.9
$region0: #{lenet_forward.9}
  #allocation0 [shape = 'u32[]', space=smem, size = 0x4, offset = 0x4, fixed_abs, tag = 'smem constant byte address 0x4 - core index']
  #allocation1 [shape = 'u32[144,128]{1,0:T(1,128)}', space=vmem, size = 0x12000, scoped, tag = 'internal scratch']
  %s0 = inlined_call_operand.vmem [shape: bf16[8,512], index: 0, kind: input, shape index: {}]
  %s1 = inlined_call_operand.vmem [shape: bf16[512,128], index: 1, kind: input, shape index: {}]
  %s2 = inlined_call_operand.vmem [shape: f32[1,128], index: 2, kind: input, shape index: {}]
  %s3 = inlined_call_operand.vmem [shape: bf16[128,128], index: 3, kind: input, shape index: {}]
  %s4 = inlined_call_operand.vmem [shape: f32[1,128], index: 4, kind: input, shape index: {}]
  %s5 = inlined_call_operand.vmem [shape: bf16[128,128], index: 5, kind: input, shape index: {}]
  %s6 = inlined_call_operand.vmem [shape: f32[1,128], index: 6, kind: input, shape index: {}]
  %s7 = inlined_call_operand.vmem [shape: f32[8,128], index: 7, kind: output, shape index: {}]
  %s8 = sld [smem:[#allocation0]]
  $region38: #{lenet_forward.9} parent=0
    _
  %s10 = ssub.s32 1, %s8
  %s11 = scalar_select 0, %s10, %s8
  // Predicated region
  $region2: #{lenet_forward.9} parent=0 // pred_check
    _
  $region3: #{lenet_forward.9} parent=0 // pred_check_branch
    %13 = sbr.rel (0) target = $region5
  $region4: #{lenet_forward.9} parent=0 // pred_region
    _
  $region5: #{lenet_forward.9} parent=0 // pred_fallthru
    _
  // Predicated region
  $region6: #{lenet_forward.9} parent=0 // pred_check
    _
  $region7: #{lenet_forward.9} parent=0 // pred_check_branch
    %15 = sbr.rel (0) target = $region9
  $region8: #{lenet_forward.9} parent=0 // pred_region
    _
  $region9: #{lenet_forward.9} parent=0 // pred_fallthru
    _
  // Predicated region
  $region10: #{lenet_forward.9} parent=0 // pred_check
    _
  $region11: #{lenet_forward.9} parent=0 // pred_check_branch
    %17 = sbr.rel (0) target = $region13
  $region12: #{lenet_forward.9} parent=0 // pred_region
    _
  $region13: #{lenet_forward.9} parent=0 // pred_fallthru
    _
  // Predicated region
  $region14: #{lenet_forward.9} parent=0 // pred_check
    _
  $region15: #{lenet_forward.9} parent=0 // pred_check_branch
    %19 = sbr.rel (0) target = $region17
  $region16: #{lenet_forward.9} parent=0 // pred_region
    _
  $region17: #{lenet_forward.9} parent=0 // pred_fallthru
    _
  // Predicated region
  $region18: #{lenet_forward.9} parent=0 // pred_check
    _
  $region19: #{lenet_forward.9} parent=0 // pred_check_branch
    %21 = sbr.rel (0) target = $region21
  $region20: #{lenet_forward.9} parent=0 // pred_region
    _
  $region21: #{lenet_forward.9} parent=0 // pred_fallthru
    _
  // Predicated region
  $region22: #{lenet_forward.9} parent=0 // pred_check
    _
  $region23: #{lenet_forward.9} parent=0 // pred_check_branch
    %23 = sbr.rel (0) target = $region25
  $region24: #{lenet_forward.9} parent=0 // pred_region
    _
  $region25: #{lenet_forward.9} parent=0 // pred_fallthru
    _
  // Predicated region
  $region26: #{lenet_forward.9} parent=0 // pred_check
    _
  $region27: #{lenet_forward.9} parent=0 // pred_check_branch
    %25 = sbr.rel (0) target = $region29
  $region28: #{lenet_forward.9} parent=0 // pred_region
    _
  $region29: #{lenet_forward.9} parent=0 // pred_fallthru
    _
  %v27 = vld [vmem:[%s0] sm:$0xff]
  %v28 = vld [vmem:[%s0 + $0x8] sm:$0xff]
  %v29 = vld [vmem:[%s1] sm:$0xf]
  %v30 = vld [vmem:[%s1 + $0x4] sm:$0xf]
  %v31 = vld [vmem:[%s1 + $0x8] sm:$0xf]
  %v32 = vld [vmem:[%s1 + $0xc] sm:$0xf]
  %v33 = vld [vmem:[%s1 + $0x10] sm:$0xf]
  %v34 = vld [vmem:[%s1 + $0x14] sm:$0xf]
  %v35 = vld [vmem:[%s1 + $0x18] sm:$0xf]
  %v36 = vld [vmem:[%s1 + $0x1c] sm:$0xf]
  %v37 = vld [vmem:[%s1 + $0x20] sm:$0xf]
  %v38 = vld [vmem:[%s1 + $0x24] sm:$0xf]
  %v39 = vld [vmem:[%s1 + $0x28] sm:$0xf]
  %v40 = vld [vmem:[%s1 + $0x2c] sm:$0xf]
  %v41 = vld [vmem:[%s1 + $0x30] sm:$0xf]
  %v42 = vld [vmem:[%s1 + $0x34] sm:$0xf]
  %v43 = vld [vmem:[%s1 + $0x38] sm:$0xf]
  %v44 = vld [vmem:[%s1 + $0x3c] sm:$0xf]
  %v45 = vld [vmem:[%s1 + $0x40] sm:$0xf]
  %v46 = vld [vmem:[%s1 + $0x44] sm:$0xf]
  %v47 = vld [vmem:[%s1 + $0x48] sm:$0xf]
  %v48 = vld [vmem:[%s1 + $0x4c] sm:$0xf]
  %v49 = vld [vmem:[%s1 + $0x50] sm:$0xf]
  %v50 = vld [vmem:[%s1 + $0x54] sm:$0xf]
  %v51 = vld [vmem:[%s1 + $0x58] sm:$0xf]
  %v52 = vld [vmem:[%s1 + $0x5c] sm:$0xf]
  %v53 = vld [vmem:[%s1 + $0x60] sm:$0xf]
  %v54 = vld [vmem:[%s1 + $0x64] sm:$0xf]
  %v55 = vld [vmem:[%s1 + $0x68] sm:$0xf]
  %v56 = vld [vmem:[%s1 + $0x6c] sm:$0xf]
  %v57 = vld [vmem:[%s1 + $0x70] sm:$0xf]
  %v58 = vld [vmem:[%s1 + $0x74] sm:$0xf]
  %v59 = vld [vmem:[%s1 + $0x78] sm:$0xf]
  %v60 = vld [vmem:[%s1 + $0x7c] sm:$0xf]
  %v61 = vld [vmem:[%s1 + $0x80] sm:$0xf]
  %v62 = vld [vmem:[%s1 + $0x84] sm:$0xf]
  %v63 = vld [vmem:[%s1 + $0x88] sm:$0xf]
  %v64 = vld [vmem:[%s1 + $0x8c] sm:$0xf]
  %v65 = vld [vmem:[%s1 + $0x90] sm:$0xf]
  %v66 = vld [vmem:[%s1 + $0x94] sm:$0xf]
  %v67 = vld [vmem:[%s1 + $0x98] sm:$0xf]
  %v68 = vld [vmem:[%s1 + $0x9c] sm:$0xf]
  %v69 = vld [vmem:[%s1 + $0xa0] sm:$0xf]
  %v70 = vld [vmem:[%s1 + $0xa4] sm:$0xf]
  %v71 = vld [vmem:[%s1 + $0xa8] sm:$0xf]
  %v72 = vld [vmem:[%s1 + $0xac] sm:$0xf]
  %v73 = vld [vmem:[%s1 + $0xb0] sm:$0xf]
  %v74 = vld [vmem:[%s1 + $0xb4] sm:$0xf]
  %v75 = vld [vmem:[%s1 + $0xb8] sm:$0xf]
  %v76 = vld [vmem:[%s1 + $0xbc] sm:$0xf]
  %v77 = vld [vmem:[%s1 + $0xc0] sm:$0xf]
  %v78 = vld [vmem:[%s1 + $0xc4] sm:$0xf]
  %v79 = vld [vmem:[%s1 + $0xc8] sm:$0xf]
  %v80 = vld [vmem:[%s1 + $0xcc] sm:$0xf]
  %v81 = vld [vmem:[%s1 + $0xd0] sm:$0xf]
  %v82 = vld [vmem:[%s1 + $0xd4] sm:$0xf]
  %v83 = vld [vmem:[%s1 + $0xd8] sm:$0xf]
  %v84 = vld [vmem:[%s1 + $0xdc] sm:$0xf]
  %v85 = vld [vmem:[%s1 + $0xe0] sm:$0xf]
  %v86 = vld [vmem:[%s1 + $0xe4] sm:$0xf]
  %v87 = vld [vmem:[%s1 + $0xe8] sm:$0xf]
  %v88 = vld [vmem:[%s1 + $0xec] sm:$0xf]
  %v89 = vld [vmem:[%s1 + $0xf0] sm:$0xf]
  %v90 = vld [vmem:[%s1 + $0xf4] sm:$0xf]
  %v91 = vld [vmem:[%s1 + $0xf8] sm:$0xf]
  %v92 = vld [vmem:[%s1 + $0xfc] sm:$0xf]
  %v93 = vld [vmem:[%s2] sm:$0x1]
  %v95 = vlaneseq
  %v96 = vshrl.u32 %v95, 7
  %v97 = vsub.s32 0, %v96
  %v98 = vrot.slane %v93, %v97
  %v102 = vunpack.c.l.b16 %v27
  %v103 = vunpack.c.h.b16 %v27
  %v104 = vunpack.c.l.b16 %v28
  %v105 = vunpack.c.h.b16 %v28
  %v106 = vpack.c.b16 %v102, %v102
  %v107 = vpack.c.b16 %v103, %v103
  %v108 = vpack.c.b16 %v104, %v104
  %v109 = vpack.c.b16 %v105, %v105
  %v178 = vunpack.c.l.b16 %v29
  %v179 = vunpack.c.l.b16 %v30
  %v180 = vunpack.c.l.b16 %v31
  %v181 = vunpack.c.l.b16 %v32
  %v182 = vunpack.c.l.b16 %v33
  %v183 = vunpack.c.l.b16 %v34
  %v184 = vunpack.c.l.b16 %v35
  %v185 = vunpack.c.l.b16 %v36
  %v186 = vunpack.c.l.b16 %v37
  %v187 = vunpack.c.l.b16 %v38
  %v188 = vunpack.c.l.b16 %v39
  %v189 = vunpack.c.l.b16 %v40
  %v190 = vunpack.c.l.b16 %v41
  %v191 = vunpack.c.l.b16 %v42
  %v192 = vunpack.c.l.b16 %v43
  %v193 = vunpack.c.l.b16 %v44
  %v194 = vunpack.c.l.b16 %v45
  %v195 = vunpack.c.l.b16 %v46
  %v196 = vunpack.c.l.b16 %v47
  %v197 = vunpack.c.l.b16 %v48
  %v198 = vunpack.c.l.b16 %v49
  %v199 = vunpack.c.l.b16 %v50
  %v200 = vunpack.c.l.b16 %v51
  %v201 = vunpack.c.l.b16 %v52
  %v202 = vunpack.c.l.b16 %v53
  %v203 = vunpack.c.l.b16 %v54
  %v204 = vunpack.c.l.b16 %v55
  %v205 = vunpack.c.l.b16 %v56
  %v206 = vunpack.c.l.b16 %v57
  %v207 = vunpack.c.l.b16 %v58
  %v208 = vunpack.c.l.b16 %v59
  %v209 = vunpack.c.l.b16 %v60
  %v210 = vunpack.c.l.b16 %v61
  %v211 = vunpack.c.l.b16 %v62
  %v212 = vunpack.c.l.b16 %v63
  %v213 = vunpack.c.l.b16 %v64
  %v214 = vunpack.c.l.b16 %v65
  %v215 = vunpack.c.l.b16 %v66
  %v216 = vunpack.c.l.b16 %v67
  %v217 = vunpack.c.l.b16 %v68
  %v218 = vunpack.c.l.b16 %v69
  %v219 = vunpack.c.l.b16 %v70
  %v220 = vunpack.c.l.b16 %v71
  %v221 = vunpack.c.l.b16 %v72
  %v222 = vunpack.c.l.b16 %v73
  %v223 = vunpack.c.l.b16 %v74
  %v224 = vunpack.c.l.b16 %v75
  %v225 = vunpack.c.l.b16 %v76
  %v226 = vunpack.c.l.b16 %v77
  %v227 = vunpack.c.l.b16 %v78
  %v228 = vunpack.c.l.b16 %v79
  %v229 = vunpack.c.l.b16 %v80
  %v230 = vunpack.c.l.b16 %v81
  %v231 = vunpack.c.l.b16 %v82
  %v232 = vunpack.c.l.b16 %v83
  %v233 = vunpack.c.l.b16 %v84
  %v234 = vunpack.c.l.b16 %v85
  %v235 = vunpack.c.l.b16 %v86
  %v236 = vunpack.c.l.b16 %v87
  %v237 = vunpack.c.l.b16 %v88
  %v238 = vunpack.c.l.b16 %v89
  %v239 = vunpack.c.l.b16 %v90
  %v240 = vunpack.c.l.b16 %v91
  %v241 = vunpack.c.l.b16 %v92
  %v242 = vpack.c.b16 %v179, %v178
  %v243 = vpack.c.b16 %v181, %v180
  %v244 = vpack.c.b16 %v183, %v182
  %v245 = vpack.c.b16 %v185, %v184
  %v246 = vpack.c.b16 %v187, %v186
  %v247 = vpack.c.b16 %v189, %v188
  %v248 = vpack.c.b16 %v191, %v190
  %v249 = vpack.c.b16 %v193, %v192
  %v250 = vpack.c.b16 %v195, %v194
  %v251 = vpack.c.b16 %v197, %v196
  %v252 = vpack.c.b16 %v199, %v198
  %v253 = vpack.c.b16 %v201, %v200
  %v254 = vpack.c.b16 %v203, %v202
  %v255 = vpack.c.b16 %v205, %v204
  %v256 = vpack.c.b16 %v207, %v206
  %v257 = vpack.c.b16 %v209, %v208
  %v258 = vpack.c.b16 %v211, %v210
  %v259 = vpack.c.b16 %v213, %v212
  %v260 = vpack.c.b16 %v215, %v214
  %v261 = vpack.c.b16 %v217, %v216
  %v262 = vpack.c.b16 %v219, %v218
  %v263 = vpack.c.b16 %v221, %v220
  %v264 = vpack.c.b16 %v223, %v222
  %v265 = vpack.c.b16 %v225, %v224
  %v266 = vpack.c.b16 %v227, %v226
  %v267 = vpack.c.b16 %v229, %v228
  %v268 = vpack.c.b16 %v231, %v230
  %v269 = vpack.c.b16 %v233, %v232
  %v270 = vpack.c.b16 %v235, %v234
  %v271 = vpack.c.b16 %v237, %v236
  %v272 = vpack.c.b16 %v239, %v238
  %v273 = vpack.c.b16 %v241, %v240
  %306 = vmatprep.subr.bf16.mxu0 0
  %307 = vmatpush1.bf16.msra.mxu0 %v242
  %308 = vmatprep.subr.bf16.mxu0 0
  %309 = vmatpush1.bf16.msra.mxu0 %v243
  %310 = vmatprep.subr.bf16.mxu0 0
  %311 = vmatpush1.bf16.msra.mxu0 %v244
  %312 = vmatprep.subr.bf16.mxu0 0
  %313 = vmatpush1.bf16.msra.mxu0 %v245
  %314 = vmatprep.subr.bf16.mxu0 0
  %315 = vmatpush1.bf16.msra.mxu0 %v246
  %316 = vmatprep.subr.bf16.mxu0 0
  %317 = vmatpush1.bf16.msra.mxu0 %v247
  %318 = vmatprep.subr.bf16.mxu0 0
  %319 = vmatpush1.bf16.msra.mxu0 %v248
  %320 = vmatprep.subr.bf16.mxu0 0
  %321 = vmatpush1.bf16.msra.mxu0 %v249
  %322 = vmatprep.subr.bf16.mxu0 0
  %323 = vmatpush1.bf16.msra.mxu0 %v250
  %324 = vmatprep.subr.bf16.mxu0 0
  %325 = vmatpush1.bf16.msra.mxu0 %v251
  %326 = vmatprep.subr.bf16.mxu0 0
  %327 = vmatpush1.bf16.msra.mxu0 %v252
  %328 = vmatprep.subr.bf16.mxu0 0
  %329 = vmatpush1.bf16.msra.mxu0 %v253
  %330 = vmatprep.subr.bf16.mxu0 0
  %331 = vmatpush1.bf16.msra.mxu0 %v254
  %332 = vmatprep.subr.bf16.mxu0 0
  %333 = vmatpush1.bf16.msra.mxu0 %v255
  %334 = vmatprep.subr.bf16.mxu0 0
  %335 = vmatpush1.bf16.msra.mxu0 %v256
  %336 = vmatprep.subr.bf16.mxu0 0
  %337 = vmatpush1.bf16.msra.mxu0 %v257
  %338 = vmatprep.mubr.bf16.mxu0 %v107
  %339 = vmatmul.mubr.bf16.gmra.mrb[0].mxu0 %v106
  %v340 = vpop.f32.mrb[0].mxu0
  %v341 = vadd.f32 %v98, %v340
  %v342 = vpop.f32.mrb[0].mxu0
  %v343 = vpop.f32.mrb[0].mxu0
  %v344 = vpop.f32.mrb[0].mxu0
  %345 = vdwg.mxu0
  %346 = vmatprep.subr.bf16.mxu0 0
  %347 = vmatpush1.bf16.msra.mxu0 %v258
  %348 = vmatprep.subr.bf16.mxu0 0
  %349 = vmatpush1.bf16.msra.mxu0 %v259
  %350 = vmatprep.subr.bf16.mxu0 0
  %351 = vmatpush1.bf16.msra.mxu0 %v260
  %352 = vmatprep.subr.bf16.mxu0 0
  %353 = vmatpush1.bf16.msra.mxu0 %v261
  %354 = vmatprep.subr.bf16.mxu0 0
  %355 = vmatpush1.bf16.msra.mxu0 %v262
  %356 = vmatprep.subr.bf16.mxu0 0
  %357 = vmatpush1.bf16.msra.mxu0 %v263
  %358 = vmatprep.subr.bf16.mxu0 0
  %359 = vmatpush1.bf16.msra.mxu0 %v264
  %360 = vmatprep.subr.bf16.mxu0 0
  %361 = vmatpush1.bf16.msra.mxu0 %v265
  %362 = vmatprep.subr.bf16.mxu0 0
  %363 = vmatpush1.bf16.msra.mxu0 %v266
  %364 = vmatprep.subr.bf16.mxu0 0
  %365 = vmatpush1.bf16.msra.mxu0 %v267
  %366 = vmatprep.subr.bf16.mxu0 0
  %367 = vmatpush1.bf16.msra.mxu0 %v268
  %368 = vmatprep.subr.bf16.mxu0 0
  %369 = vmatpush1.bf16.msra.mxu0 %v269
  %370 = vmatprep.subr.bf16.mxu0 0
  %371 = vmatpush1.bf16.msra.mxu0 %v270
  %372 = vmatprep.subr.bf16.mxu0 0
  %373 = vmatpush1.bf16.msra.mxu0 %v271
  %374 = vmatprep.subr.bf16.mxu0 0
  %375 = vmatpush1.bf16.msra.mxu0 %v272
  %376 = vmatprep.subr.bf16.mxu0 0
  %377 = vmatpush1.bf16.msra.mxu0 %v273
  %378 = vmatprep.mubr.bf16.mxu0 %v109
  %379 = vmatmul.mubr.bf16.gmra.mrb[0].mxu0 %v108
  %v380 = vpop.f32.mrb[0].mxu0
  %v381 = vadd.f32 %v341, %v380
  %v382 = vpop.f32.mrb[0].mxu0
  %v383 = vpop.f32.mrb[0].mxu0
  %v384 = vpop.f32.mrb[0].mxu0
  %385 = vdwg.mxu0
  %v386 = vmax.f32 %v381, 0.0
  %v387 = vpack.c.bf16 %v386, %v386
  %v388 = vld [vmem:[%s3] sm:$0xf]
  %v389 = vld [vmem:[%s3 + $0x4] sm:$0xf]
  %v390 = vld [vmem:[%s3 + $0x8] sm:$0xf]
  %v391 = vld [vmem:[%s3 + $0xc] sm:$0xf]
  %v392 = vld [vmem:[%s3 + $0x10] sm:$0xf]
  %v393 = vld [vmem:[%s3 + $0x14] sm:$0xf]
  %v394 = vld [vmem:[%s3 + $0x18] sm:$0xf]
  %v395 = vld [vmem:[%s3 + $0x1c] sm:$0xf]
  %v396 = vld [vmem:[%s3 + $0x20] sm:$0xf]
  %v397 = vld [vmem:[%s3 + $0x24] sm:$0xf]
  %v398 = vld [vmem:[%s3 + $0x28] sm:$0xf]
  %v399 = vld [vmem:[%s3 + $0x2c] sm:$0xf]
  %v400 = vld [vmem:[%s3 + $0x30] sm:$0xf]
  %v401 = vld [vmem:[%s3 + $0x34] sm:$0xf]
  %v402 = vld [vmem:[%s3 + $0x38] sm:$0xf]
  %v403 = vld [vmem:[%s3 + $0x3c] sm:$0xf]
  %v404 = vld [vmem:[%s4] sm:$0x1]
  %v406 = vlaneseq
  %v407 = vshrl.u32 %v406, 7
  %v408 = vsub.s32 0, %v407
  %v409 = vrot.slane %v404, %v408
  %v427 = vunpack.c.l.b16 %v388
  %v428 = vunpack.c.l.b16 %v389
  %v429 = vunpack.c.l.b16 %v390
  %v430 = vunpack.c.l.b16 %v391
  %v431 = vunpack.c.l.b16 %v392
  %v432 = vunpack.c.l.b16 %v393
  %v433 = vunpack.c.l.b16 %v394
  %v434 = vunpack.c.l.b16 %v395
  %v435 = vunpack.c.l.b16 %v396
  %v436 = vunpack.c.l.b16 %v397
  %v437 = vunpack.c.l.b16 %v398
  %v438 = vunpack.c.l.b16 %v399
  %v439 = vunpack.c.l.b16 %v400
  %v440 = vunpack.c.l.b16 %v401
  %v441 = vunpack.c.l.b16 %v402
  %v442 = vunpack.c.l.b16 %v403
  %v443 = vpack.c.b16 %v428, %v427
  %v444 = vpack.c.b16 %v430, %v429
  %v445 = vpack.c.b16 %v432, %v431
  %v446 = vpack.c.b16 %v434, %v433
  %v447 = vpack.c.b16 %v436, %v435
  %v448 = vpack.c.b16 %v438, %v437
  %v449 = vpack.c.b16 %v440, %v439
  %v450 = vpack.c.b16 %v442, %v441
  %459 = vmatprep.subr.bf16.mxu0 0
  %460 = vmatpush1.bf16.msra.mxu0 %v443
  %461 = vmatprep.subr.bf16.mxu0 0
  %462 = vmatpush1.bf16.msra.mxu0 %v444
  %463 = vmatprep.subr.bf16.mxu0 0
  %464 = vmatpush1.bf16.msra.mxu0 %v445
  %465 = vmatprep.subr.bf16.mxu0 0
  %466 = vmatpush1.bf16.msra.mxu0 %v446
  %467 = vmatprep.subr.bf16.mxu0 0
  %468 = vmatpush1.bf16.msra.mxu0 %v447
  %469 = vmatprep.subr.bf16.mxu0 0
  %470 = vmatpush1.bf16.msra.mxu0 %v448
  %471 = vmatprep.subr.bf16.mxu0 0
  %472 = vmatpush1.bf16.msra.mxu0 %v449
  %473 = vmatprep.subr.bf16.mxu0 0
  %474 = vmatpush1.bf16.msra.mxu0 %v450
  %475 = vmatprep.subr.bf16.mxu0 0
  %476 = vmatpush1.bf16.msra.mxu0 0
  %477 = vmatprep.subr.bf16.mxu0 0
  %478 = vmatpush1.bf16.msra.mxu0 0
  %479 = vmatprep.subr.bf16.mxu0 0
  %480 = vmatpush1.bf16.msra.mxu0 0
  %481 = vmatprep.subr.bf16.mxu0 0
  %482 = vmatpush1.bf16.msra.mxu0 0
  %483 = vmatprep.subr.bf16.mxu0 0
  %484 = vmatpush1.bf16.msra.mxu0 0
  %485 = vmatprep.subr.bf16.mxu0 0
  %486 = vmatpush1.bf16.msra.mxu0 0
  %487 = vmatprep.subr.bf16.mxu0 0
  %488 = vmatpush1.bf16.msra.mxu0 0
  %489 = vmatprep.subr.bf16.mxu0 0
  %490 = vmatpush1.bf16.msra.mxu0 0
  %491 = vmatprep.mubr.bf16.mxu0 0
  %492 = vmatmul.mubr.bf16.gmra.mrb[0].mxu0 %v387
  %v493 = vpop.f32.mrb[0].mxu0
  %v494 = vadd.f32 %v409, %v493
  %v495 = vpop.f32.mrb[0].mxu0
  %v496 = vpop.f32.mrb[0].mxu0
  %v497 = vpop.f32.mrb[0].mxu0
  %498 = vdwg.mxu0
  %v499 = vmax.f32 %v494, 0.0
  %v500 = vpack.c.bf16 %v499, %v499
  %v501 = vld [vmem:[%s5] sm:$0xf]
  %v502 = vld [vmem:[%s5 + $0x4] sm:$0xf]
  %v503 = vld [vmem:[%s5 + $0x8] sm:$0xf]
  %v504 = vld [vmem:[%s5 + $0xc] sm:$0xf]
  %v505 = vld [vmem:[%s5 + $0x10] sm:$0xf]
  %v506 = vld [vmem:[%s5 + $0x14] sm:$0xf]
  %v507 = vld [vmem:[%s5 + $0x18] sm:$0xf]
  %v508 = vld [vmem:[%s5 + $0x1c] sm:$0xf]
  %v509 = vld [vmem:[%s5 + $0x20] sm:$0xf]
  %v510 = vld [vmem:[%s5 + $0x24] sm:$0xf]
  %v511 = vld [vmem:[%s5 + $0x28] sm:$0xf]
  %v512 = vld [vmem:[%s5 + $0x2c] sm:$0xf]
  %v513 = vld [vmem:[%s5 + $0x30] sm:$0xf]
  %v514 = vld [vmem:[%s5 + $0x34] sm:$0xf]
  %v515 = vld [vmem:[%s5 + $0x38] sm:$0xf]
  %v516 = vld [vmem:[%s5 + $0x3c] sm:$0xf]
  %v517 = vld [vmem:[%s6] sm:$0x1]
  %v519 = vlaneseq
  %v520 = vshrl.u32 %v519, 7
  %v521 = vsub.s32 0, %v520
  %v522 = vrot.slane %v517, %v521
  %v540 = vunpack.c.l.b16 %v501
  %v541 = vunpack.c.l.b16 %v502
  %v542 = vunpack.c.l.b16 %v503
  %v543 = vunpack.c.l.b16 %v504
  %v544 = vunpack.c.l.b16 %v505
  %v545 = vunpack.c.l.b16 %v506
  %v546 = vunpack.c.l.b16 %v507
  %v547 = vunpack.c.l.b16 %v508
  %v548 = vunpack.c.l.b16 %v509
  %v549 = vunpack.c.l.b16 %v510
  %v550 = vunpack.c.l.b16 %v511
  %v551 = vunpack.c.l.b16 %v512
  %v552 = vunpack.c.l.b16 %v513
  %v553 = vunpack.c.l.b16 %v514
  %v554 = vunpack.c.l.b16 %v515
  %v555 = vunpack.c.l.b16 %v516
  %v556 = vpack.c.b16 %v541, %v540
  %v557 = vpack.c.b16 %v543, %v542
  %v558 = vpack.c.b16 %v545, %v544
  %v559 = vpack.c.b16 %v547, %v546
  %v560 = vpack.c.b16 %v549, %v548
  %v561 = vpack.c.b16 %v551, %v550
  %v562 = vpack.c.b16 %v553, %v552
  %v563 = vpack.c.b16 %v555, %v554
  %572 = vmatprep.subr.bf16.mxu0 0
  %573 = vmatpush1.bf16.msra.mxu0 %v556
  %574 = vmatprep.subr.bf16.mxu0 0
  %575 = vmatpush1.bf16.msra.mxu0 %v557
  %576 = vmatprep.subr.bf16.mxu0 0
  %577 = vmatpush1.bf16.msra.mxu0 %v558
  %578 = vmatprep.subr.bf16.mxu0 0
  %579 = vmatpush1.bf16.msra.mxu0 %v559
  %580 = vmatprep.subr.bf16.mxu0 0
  %581 = vmatpush1.bf16.msra.mxu0 %v560
  %582 = vmatprep.subr.bf16.mxu0 0
  %583 = vmatpush1.bf16.msra.mxu0 %v561
  %584 = vmatprep.subr.bf16.mxu0 0
  %585 = vmatpush1.bf16.msra.mxu0 %v562
  %586 = vmatprep.subr.bf16.mxu0 0
  %587 = vmatpush1.bf16.msra.mxu0 %v563
  %588 = vmatprep.subr.bf16.mxu0 0
  %589 = vmatpush1.bf16.msra.mxu0 0
  %590 = vmatprep.subr.bf16.mxu0 0
  %591 = vmatpush1.bf16.msra.mxu0 0
  %592 = vmatprep.subr.bf16.mxu0 0
  %593 = vmatpush1.bf16.msra.mxu0 0
  %594 = vmatprep.subr.bf16.mxu0 0
  %595 = vmatpush1.bf16.msra.mxu0 0
  %596 = vmatprep.subr.bf16.mxu0 0
  %597 = vmatpush1.bf16.msra.mxu0 0
  %598 = vmatprep.subr.bf16.mxu0 0
  %599 = vmatpush1.bf16.msra.mxu0 0
  %600 = vmatprep.subr.bf16.mxu0 0
  %601 = vmatpush1.bf16.msra.mxu0 0
  %602 = vmatprep.subr.bf16.mxu0 0
  %603 = vmatpush1.bf16.msra.mxu0 0
  %604 = vmatprep.mubr.bf16.mxu0 0
  %605 = vmatmul.mubr.bf16.gmra.mrb[0].mxu0 %v500
  %v606 = vpop.f32.mrb[0].mxu0
  %v607 = vadd.f32 %v522, %v606
  %v608 = vpop.f32.mrb[0].mxu0
  %v609 = vpop.f32.mrb[0].mxu0
  %v610 = vpop.f32.mrb[0].mxu0
  %611 = vdwg.mxu0
  %612 = vst [vmem:[%s7] sm:$0xff] %v607
  // Predicated region
  $region30: #{lenet_forward.9} parent=0 // pred_check
    _
  $region31: #{lenet_forward.9} parent=0 // pred_check_branch
    %614 = sbr.rel (0) target = $region33
  $region32: #{lenet_forward.9} parent=0 // pred_region
    _
  $region33: #{lenet_forward.9} parent=0 // pred_fallthru
    _
  // Predicated region
  $region34: #{lenet_forward.9} parent=0 // pred_check
    _
  $region35: #{lenet_forward.9} parent=0 // pred_check_branch
    %616 = sbr.rel (0) target = $region37
  $region36: #{lenet_forward.9} parent=0 // pred_region
    _
  $region37: #{lenet_forward.9} parent=0 // pred_fallthru
    _

</llo_original>
